<compile_context>
chip_gen: v6e
topology: v6e:2x2x1
jax: 0.10.0
libtpu: 0.0.40
codegen_flags: <defaults>
</compile_context>

<pallas_src>
import functools
import math

import jax
import jax.numpy as jnp
from jax import lax
from jax.experimental import pallas as pl
from jax.experimental.pallas import tpu as pltpu


def _mha_kernel(x_ref, wqkv_ref, wproj_ref, bproj_ref, o_ref, *,
                num_heads, head_size):
    # x_ref:     (B, T, C)
    # wqkv_ref:  (H, C, 3*Hs)  per-head fused projection, columns = [q | k | v]
    # wproj_ref: (H, Hs, C)    per-head rows of the (pre-transposed) proj weight
    # bproj_ref: (1, C)        projection bias
    # o_ref:     (B, T, C)
    B, T, C = x_ref.shape
    H, Hs = num_heads, head_size
    BH = B * H

    x = x_ref[...]            # (B, T, C)
    wqkv = wqkv_ref[...]      # (H, C, 3*Hs)
    wproj = wproj_ref[...]    # (H, Hs, C)

    # Broadcast activations over heads and weights over batch, then merge the
    # (B, H) leading dims into one batch dim. These broadcasts/reshapes only
    # touch untiled leading dims (vreg replication / re-indexing) -- no
    # lane/sublane relayouts and no transposes.
    x_bh = jnp.broadcast_to(x[:, None, :, :], (B, H, T, C)).reshape(BH, T, C)
    wqkv_bh = jnp.broadcast_to(wqkv[None], (B, H, C, 3 * Hs)).reshape(BH, C, 3 * Hs)

    # Per-(batch, head) fused Q/K/V projection as ONE batched MXU contraction.
    qkv = jnp.einsum('btc,bcf->btf', x_bh, wqkv_bh,
                     preferred_element_type=jnp.float32)        # (BH, T, 3*Hs)
    q = qkv[:, :, 0:Hs]
    k = qkv[:, :, Hs:2 * Hs]
    v = qkv[:, :, 2 * Hs:3 * Hs]

    # Causal additive mask, built once and broadcast over every (batch, head).
    # Finite -1e30 (not -inf) keeps arithmetic NaN-free; the causal diagonal
    # already guarantees at least one unmasked key per row.
    row = lax.broadcasted_iota(jnp.int32, (T, T), 0)
    col = lax.broadcasted_iota(jnp.int32, (T, T), 1)
    neg_mask = jnp.where(col <= row, jnp.float32(0.0), jnp.float32(-1e30))

    # NOTE: the module scales by sqrt(n_embed) (= C), not sqrt(head_size).
    inv_scale = jnp.float32(1.0 / math.sqrt(C))

    # Q@K^T for every (batch, head) at once; contract last dims (no k.T).
    s = jnp.einsum('bqd,bkd->bqk', q, k,
                   preferred_element_type=jnp.float32)          # (BH, T, T)
    s = s * inv_scale + neg_mask[None, :, :]

    # One numerically-stable softmax over the whole (BH, T, T) block.
    s = s - jnp.max(s, axis=-1, keepdims=True)
    e = jnp.exp(s)
    p = e * pl.reciprocal(jnp.sum(e, axis=-1, keepdims=True), approx=True)
    # TODO(synk): attention dropout (p=0.1) omitted -- eval-mode identity.

    # P@V for every (batch, head) at once.
    ctx = jnp.einsum('bqk,bkd->bqd', p, v,
                     preferred_element_type=jnp.float32)        # (BH, T, Hs)

    # Output projection, batched per head, then accumulated over heads.
    # Identical to concat(heads) @ W_proj, but stays in registers: no
    # (B*T, H*Hs) lane-concat, no VMEM scratch, no masked partial stores.
    wproj_bh = jnp.broadcast_to(wproj[None], (B, H, Hs, C)).reshape(BH, Hs, C)
    partial = jnp.einsum('btd,bdc->btc', ctx, wproj_bh,
                         preferred_element_type=jnp.float32)    # (BH, T, C)
    partial = partial.reshape(B, H, T, C)
    out = partial[:, 0]
    for h in range(1, H):   # static accumulation over the tiny head dim (VPU adds)
        out = out + partial[:, h]
    out = out + bproj_ref[...]                                  # (1, C) broadcasts
    # TODO(synk): output dropout (p=0.1) omitted -- eval-mode identity.
    o_ref[...] = out.astype(o_ref.dtype)


def multi_head_attention(x, w_qkv_h, w_proj_h, b_proj, *, num_heads, head_size):
    """Eval-mode NACJAC_MultiHeadAttention forward.

    x:        (B, T, C) with C == n_embed == num_heads * head_size
    w_qkv_h:  (num_heads, C, 3*head_size), per-head columns = [q | k | v]
    w_proj_h: (num_heads, head_size, C)   per-head rows of proj_weight.T
    b_proj:   (1, C)                      projection bias
    """
    B, T, C = x.shape
    return pl.pallas_call(
        functools.partial(_mha_kernel, num_heads=num_heads,
                          head_size=head_size),
        out_shape=jax.ShapeDtypeStruct((B, T, C), jnp.float32),
        in_specs=[
            pl.BlockSpec(memory_space=pltpu.MemorySpace.VMEM),
            pl.BlockSpec(memory_space=pltpu.MemorySpace.VMEM),
            pl.BlockSpec(memory_space=pltpu.MemorySpace.VMEM),
            pl.BlockSpec(memory_space=pltpu.MemorySpace.VMEM),
        ],
        out_specs=pl.BlockSpec(memory_space=pltpu.MemorySpace.VMEM),
    )(x, w_qkv_h, w_proj_h, b_proj)


def _reference(x, wq, wk, wv, w_proj, b_proj):
    """Plain-JAX mirror of the PyTorch module (eval mode)."""
    B, T, C = x.shape
    H = wq.shape[0]
    tril = jnp.tril(jnp.ones((T, T)))
    outs = []
    for h in range(H):
        q = x @ wq[h].T
        k = x @ wk[h].T
        v = x @ wv[h].T
        wei = q @ jnp.swapaxes(k, -2, -1) / (C ** 0.5)
        wei = jnp.where(tril == 0, -jnp.inf, wei)
        wei = jax.nn.softmax(wei, axis=-1)
        outs.append(wei @ v)
    cat = jnp.concatenate(outs, axis=-1)
    return cat @ w_proj.T + b_proj


if __name__ == "__main__":
    # Shapes consistent with the module: B=2, T=block_size=8, n_embed=64,
    # num_heads=4, head_size=16 (num_heads*head_size == n_embed).
    B, T = 2, 8
    num_heads, head_size = 4, 16
    C = num_heads * head_size          # n_embed

    key = jax.random.PRNGKey(0)
    kx, kq, kk, kv, kp, kb = jax.random.split(key, 6)

    x = jax.random.normal(kx, (B, T, C), dtype=jnp.float32)

    # Per-head nn.Linear(n_embed, head_size, bias=False) weights, PyTorch
    # layout (head_size, n_embed); proj is nn.Linear(n_embed, n_embed).
    bound = 1.0 / math.sqrt(C)
    wq = jax.random.uniform(kq, (num_heads, head_size, C), jnp.float32, -bound, bound)
    wk = jax.random.uniform(kk, (num_heads, head_size, C), jnp.float32, -bound, bound)
    wv = jax.random.uniform(kv, (num_heads, head_size, C), jnp.float32, -bound, bound)
    w_proj = jax.random.uniform(kp, (C, C), jnp.float32, -bound, bound)   # (out, in)
    b_proj = jax.random.uniform(kb, (C,), jnp.float32, -bound, bound)

    # Kernel-side packing (done once, outside the kernel):
    #   w_qkv_h[h] = [wq[h].T | wk[h].T | wv[h].T]  -> (H, C, 3*Hs)
    #   w_proj_h   = proj_weight.T split by head    -> (H, Hs, C)
    w_qkv_h = jnp.concatenate(
        [jnp.swapaxes(wq, 1, 2), jnp.swapaxes(wk, 1, 2), jnp.swapaxes(wv, 1, 2)],
        axis=2)
    w_proj_h = w_proj.T.reshape(num_heads, head_size, C)
    b_proj_2d = b_proj[None, :]

    out = multi_head_attention(x, w_qkv_h, w_proj_h, b_proj_2d,
                               num_heads=num_heads, head_size=head_size)
    out = jax.block_until_ready(out)

    ref = _reference(x, wq, wk, wv, w_proj, b_proj)
    assert out.shape == (B, T, C)
    # Tolerance relaxed vs 1e-5 because softmax uses pl.reciprocal(approx=True).
    assert jnp.allclose(out, ref, atol=2e-3, rtol=2e-3), float(
        jnp.max(jnp.abs(out - ref)))

    print("KERNEL_OK")
</pallas_src>

<mosaic_0001>
module attributes {stable_mosaic.version = 11 : i64} {
  func.func @_mha_kernel(%arg0: memref<2x8x64xf32, #tpu.memory_space<vmem>>, %arg1: memref<4x64x48xf32, #tpu.memory_space<vmem>>, %arg2: memref<4x16x64xf32, #tpu.memory_space<vmem>>, %arg3: memref<1x64xf32, #tpu.memory_space<vmem>>, %arg4: memref<2x8x64xf32, #tpu.memory_space<vmem>>) attributes {dimension_semantics = [], scalar_prefetch = 0 : i64, scratch_operands = 0 : i64, tpu.core_type = #tpu.core_type<tc>} {
    %c0 = arith.constant 0 : index
    %c0_0 = arith.constant 0 : index
    %c0_1 = arith.constant 0 : index
    %0 = vector.load %arg0[%c0, %c0_0, %c0_1] : memref<2x8x64xf32, #tpu.memory_space<vmem>>, vector<2x8x64xf32>
    %c0_2 = arith.constant 0 : index
    %c0_3 = arith.constant 0 : index
    %c0_4 = arith.constant 0 : index
    %1 = vector.load %arg1[%c0_2, %c0_3, %c0_4] : memref<4x64x48xf32, #tpu.memory_space<vmem>>, vector<4x64x48xf32>
    %c0_5 = arith.constant 0 : index
    %c0_6 = arith.constant 0 : index
    %c0_7 = arith.constant 0 : index
    %2 = vector.load %arg2[%c0_5, %c0_6, %c0_7] : memref<4x16x64xf32, #tpu.memory_space<vmem>>, vector<4x16x64xf32>
    %3 = vector.shape_cast %0 : vector<2x8x64xf32> to vector<2x1x8x64xf32>
    %4 = vector.shape_cast %3 : vector<2x1x8x64xf32> to vector<2x1x8x64xf32>
    %5 = vector.broadcast %4 : vector<2x1x8x64xf32> to vector<2x4x8x64xf32>
    %6 = vector.shape_cast %5 : vector<2x4x8x64xf32> to vector<8x8x64xf32>
    %7 = vector.shape_cast %1 : vector<4x64x48xf32> to vector<1x4x64x48xf32>
    %8 = vector.shape_cast %7 : vector<1x4x64x48xf32> to vector<1x4x64x48xf32>
    %9 = vector.broadcast %8 : vector<1x4x64x48xf32> to vector<2x4x64x48xf32>
    %10 = vector.shape_cast %9 : vector<2x4x64x48xf32> to vector<8x64x48xf32>
    "tpu.trace_start"() <{level = 10 : i32, message = "btc,bcf->btf"}> : () -> ()
    %cst = arith.constant dense<0.000000e+00> : vector<8x8x48xf32>
    %11 = tpu.matmul %6, %10, %cst {dimension_numbers = #tpu.dot_dimension_numbers<[2], [1], [1], [2], [0, 0, 0, 1, 1, 2], [0], [0]>} : vector<8x8x64xf32>, vector<8x64x48xf32>, vector<8x8x48xf32> -> vector<8x8x48xf32>
    "tpu.trace_stop"() : () -> ()
    %12 = vector.extract_strided_slice %11 {offsets = [0, 0, 0], sizes = [8, 8, 16], strides = [1, 1, 1]} : vector<8x8x48xf32> to vector<8x8x16xf32>
    %13 = vector.extract_strided_slice %11 {offsets = [0, 0, 16], sizes = [8, 8, 16], strides = [1, 1, 1]} : vector<8x8x48xf32> to vector<8x8x16xf32>
    %14 = vector.extract_strided_slice %11 {offsets = [0, 0, 32], sizes = [8, 8, 16], strides = [1, 1, 1]} : vector<8x8x48xf32> to vector<8x8x16xf32>
    %15 = tpu.iota {dimensions = array<i32: 0>} : vector<8x8xi32>
    %16 = tpu.iota {dimensions = array<i32: 1>} : vector<8x8xi32>
    %17 = arith.cmpi sle, %16, %15 : vector<8x8xi32>
    %cst_8 = arith.constant 0.000000e+00 : f32
    %cst_9 = arith.constant -1.000000e+30 : f32
    %18 = vector.broadcast %cst_8 : f32 to vector<8x8xf32>
    %19 = vector.broadcast %cst_9 : f32 to vector<8x8xf32>
    %20 = arith.select %17, %18, %19 : vector<8x8xi1>, vector<8x8xf32>
    "tpu.trace_start"() <{level = 10 : i32, message = "bqd,bkd->bqk"}> : () -> ()
    %cst_10 = arith.constant dense<0.000000e+00> : vector<8x8x8xf32>
    %21 = tpu.matmul %12, %13, %cst_10 {dimension_numbers = #tpu.dot_dimension_numbers<[2], [2], [1], [1], [0, 0, 0, 1, 1, 1], [0], [0]>} : vector<8x8x16xf32>, vector<8x8x16xf32>, vector<8x8x8xf32> -> vector<8x8x8xf32>
    "tpu.trace_stop"() : () -> ()
    %cst_11 = arith.constant 1.250000e-01 : f32
    %22 = vector.broadcast %cst_11 : f32 to vector<8x8x8xf32>
    %23 = arith.mulf %21, %22 : vector<8x8x8xf32>
    %24 = vector.shape_cast %20 : vector<8x8xf32> to vector<1x8x8xf32>
    %25 = vector.broadcast %24 : vector<1x8x8xf32> to vector<8x8x8xf32>
    %26 = arith.addf %23, %25 : vector<8x8x8xf32>
    %cst_12 = arith.constant dense<0xFF800000> : vector<8x8xf32>
    %27 = vector.multi_reduction <maximumf>, %26, %cst_12 [2] : vector<8x8x8xf32> to vector<8x8xf32>
    %28 = vector.shape_cast %27 : vector<8x8xf32> to vector<8x8x1xf32>
    %29 = vector.broadcast %28 : vector<8x8x1xf32> to vector<8x8x8xf32>
    %30 = arith.subf %26, %29 : vector<8x8x8xf32>
    %31 = math.exp %30 : vector<8x8x8xf32>
    %cst_13 = arith.constant dense<0.000000e+00> : vector<8x8xf32>
    %32 = vector.multi_reduction <add>, %31, %cst_13 [2] : vector<8x8x8xf32> to vector<8x8xf32>
    %33 = vector.shape_cast %32 : vector<8x8xf32> to vector<8x8x1xf32>
    %34 = tpu.reciprocal %33 {approx = true} : vector<8x8x1xf32> -> vector<8x8x1xf32>
    %35 = vector.broadcast %34 : vector<8x8x1xf32> to vector<8x8x8xf32>
    %36 = arith.mulf %31, %35 : vector<8x8x8xf32>
    "tpu.trace_start"() <{level = 10 : i32, message = "bqk,bkd->bqd"}> : () -> ()
    %cst_14 = arith.constant dense<0.000000e+00> : vector<8x8x16xf32>
    %37 = tpu.matmul %36, %14, %cst_14 {dimension_numbers = #tpu.dot_dimension_numbers<[2], [1], [1], [2], [0, 0, 0, 1, 1, 2], [0], [0]>} : vector<8x8x8xf32>, vector<8x8x16xf32>, vector<8x8x16xf32> -> vector<8x8x16xf32>
    "tpu.trace_stop"() : () -> ()
    %38 = vector.shape_cast %2 : vector<4x16x64xf32> to vector<1x4x16x64xf32>
    %39 = vector.shape_cast %38 : vector<1x4x16x64xf32> to vector<1x4x16x64xf32>
    %40 = vector.broadcast %39 : vector<1x4x16x64xf32> to vector<2x4x16x64xf32>
    %41 = vector.shape_cast %40 : vector<2x4x16x64xf32> to vector<8x16x64xf32>
    "tpu.trace_start"() <{level = 10 : i32, message = "btd,bdc->btc"}> : () -> ()
    %cst_15 = arith.constant dense<0.000000e+00> : vector<8x8x64xf32>
    %42 = tpu.matmul %37, %41, %cst_15 {dimension_numbers = #tpu.dot_dimension_numbers<[2], [1], [1], [2], [0, 0, 0, 1, 1, 2], [0], [0]>} : vector<8x8x16xf32>, vector<8x16x64xf32>, vector<8x8x64xf32> -> vector<8x8x64xf32>
    "tpu.trace_stop"() : () -> ()
    %43 = vector.shape_cast %42 : vector<8x8x64xf32> to vector<2x4x8x64xf32>
    %44 = vector.extract_strided_slice %43 {offsets = [0, 0, 0, 0], sizes = [2, 1, 8, 64], strides = [1, 1, 1, 1]} : vector<2x4x8x64xf32> to vector<2x1x8x64xf32>
    %45 = vector.shape_cast %44 : vector<2x1x8x64xf32> to vector<2x8x64xf32>
    %46 = vector.extract_strided_slice %43 {offsets = [0, 1, 0, 0], sizes = [2, 1, 8, 64], strides = [1, 1, 1, 1]} : vector<2x4x8x64xf32> to vector<2x1x8x64xf32>
    %47 = vector.shape_cast %46 : vector<2x1x8x64xf32> to vector<2x8x64xf32>
    %48 = arith.addf %45, %47 : vector<2x8x64xf32>
    %49 = vector.extract_strided_slice %43 {offsets = [0, 2, 0, 0], sizes = [2, 1, 8, 64], strides = [1, 1, 1, 1]} : vector<2x4x8x64xf32> to vector<2x1x8x64xf32>
    %50 = vector.shape_cast %49 : vector<2x1x8x64xf32> to vector<2x8x64xf32>
    %51 = arith.addf %48, %50 : vector<2x8x64xf32>
    %52 = vector.extract_strided_slice %43 {offsets = [0, 3, 0, 0], sizes = [2, 1, 8, 64], strides = [1, 1, 1, 1]} : vector<2x4x8x64xf32> to vector<2x1x8x64xf32>
    %53 = vector.shape_cast %52 : vector<2x1x8x64xf32> to vector<2x8x64xf32>
    %54 = arith.addf %51, %53 : vector<2x8x64xf32>
    %c0_16 = arith.constant 0 : index
    %c0_17 = arith.constant 0 : index
    %55 = vector.load %arg3[%c0_16, %c0_17] : memref<1x64xf32, #tpu.memory_space<vmem>>, vector<1x64xf32>
    %56 = vector.shape_cast %55 : vector<1x64xf32> to vector<1x1x64xf32>
    %57 = vector.broadcast %56 : vector<1x1x64xf32> to vector<2x8x64xf32>
    %58 = arith.addf %54, %57 : vector<2x8x64xf32>
    %c0_18 = arith.constant 0 : index
    %c0_19 = arith.constant 0 : index
    %c0_20 = arith.constant 0 : index
    %59 = vector.load %arg4[%c0_18, %c0_19, %c0_20] : memref<2x8x64xf32, #tpu.memory_space<vmem>>, vector<2x8x64xf32>
    tpu.vector_store %arg4[%c0_18, %c0_19, %c0_20], %58 {strides = array<i32>} : memref<2x8x64xf32, #tpu.memory_space<vmem>>, vector<2x8x64xf32>,
    return
  }
}

</mosaic_0001>

<llo_original>
// kernel: tpu_custom_call.1
$region0: #{tpu_custom_call.1}
  #allocation0 [shape = 'u32[]', space=smem, size = 0x4, offset = 0x4, fixed_abs, tag = 'smem constant byte address 0x4 - core index']
  #allocation1 [shape = 'u32[144,128]{1,0:T(1,128)}', space=vmem, size = 0x12000, scoped, tag = 'internal scratch']
  %s0 = inlined_call_operand.vmem [shape: f32[2,8,64], index: 0, kind: input, shape index: {}]
  %s1 = inlined_call_operand.vmem [shape: f32[4,64,48], index: 1, kind: input, shape index: {}]
  %s2 = inlined_call_operand.vmem [shape: f32[4,16,64], index: 2, kind: input, shape index: {}]
  %s3 = inlined_call_operand.vmem [shape: f32[1,64], index: 3, kind: input, shape index: {}]
  %s4 = inlined_call_operand.hbm [shape: f32[2,8,64], index: 4, kind: output, shape index: {}]
  %s5 = sld [smem:[#allocation0]]
  $region26: #{tpu_custom_call.1} parent=0
    _
  %s7 = ssub.s32 1, %s5
  %s8 = scalar_select 0, %s7, %s5
  $region1: #{tpu_custom_call.1} parent=0
    #allocation2 [shape = 'u8[8192]{0}', space=vmem, size = 0x2000, scoped, tag = 'output window, operand 0, single buffered']
    #allocation3 [shape = 's32[1]{0}', space=sflag, size = 0x4, scoped, tag = 'scoped memory for tpu_custom_call.1']
    %9 = vsyncpa [#allocation3], 0
    // Predicated region
    $region2: #{tpu_custom_call.1} parent=1 // pred_check
      _
    $region3: #{tpu_custom_call.1} parent=1 // pred_check_branch
      %11 = sbr.rel (0) target = $region5
    $region4: #{tpu_custom_call.1} parent=1 // pred_region
      _
    $region5: #{tpu_custom_call.1} parent=1 // pred_fallthru
      _
    // Predicated region
    $region6: #{tpu_custom_call.1} parent=1 // pred_check
      _
    $region7: #{tpu_custom_call.1} parent=1 // pred_check_branch
      %13 = sbr.rel (0) target = $region9
    $region8: #{tpu_custom_call.1} parent=1 // pred_region
      _
    $region9: #{tpu_custom_call.1} parent=1 // pred_fallthru
      _
    // Predicated region
    $region10: #{tpu_custom_call.1} parent=1 // pred_check
      _
    $region11: #{tpu_custom_call.1} parent=1 // pred_check_branch
      %15 = sbr.rel (0) target = $region13
    $region12: #{tpu_custom_call.1} parent=1 // pred_region
      _
    $region13: #{tpu_custom_call.1} parent=1 // pred_fallthru
      _
    // Predicated region
    $region14: #{tpu_custom_call.1} parent=1 // pred_check
      _
    $region15: #{tpu_custom_call.1} parent=1 // pred_check_branch
      %17 = sbr.rel (0) target = $region17
    $region16: #{tpu_custom_call.1} parent=1 // pred_region
      _
    $region17: #{tpu_custom_call.1} parent=1 // pred_fallthru
      _
    %v18 = vld [vmem:[%s0] sm:$0xff]
    %v19 = vld [vmem:[%s0 + $0x8] sm:$0xff]
    %v20 = vld [vmem:[%s1] sm:$0xff]
    %v21 = vld [vmem:[%s1 + $0x8] sm:$0xff]
    %v22 = vld [vmem:[%s1 + $0x10] sm:$0xff]
    %v23 = vld [vmem:[%s1 + $0x18] sm:$0xff]
    %v24 = vld [vmem:[%s1 + $0x20] sm:$0xff]
    %v25 = vld [vmem:[%s1 + $0x28] sm:$0xff]
    %v26 = vld [vmem:[%s1 + $0x30] sm:$0xff]
    %v27 = vld [vmem:[%s1 + $0x38] sm:$0xff]
    %v28 = vld [vmem:[%s1 + $0x40] sm:$0xff]
    %v29 = vld [vmem:[%s1 + $0x48] sm:$0xff]
    %v30 = vld [vmem:[%s1 + $0x50] sm:$0xff]
    %v31 = vld [vmem:[%s1 + $0x58] sm:$0xff]
    %v32 = vld [vmem:[%s1 + $0x60] sm:$0xff]
    %v33 = vld [vmem:[%s1 + $0x68] sm:$0xff]
    %v34 = vld [vmem:[%s1 + $0x70] sm:$0xff]
    %v35 = vld [vmem:[%s1 + $0x78] sm:$0xff]
    %v36 = vld [vmem:[%s1 + $0x80] sm:$0xff]
    %v37 = vld [vmem:[%s1 + $0x88] sm:$0xff]
    %v38 = vld [vmem:[%s1 + $0x90] sm:$0xff]
    %v39 = vld [vmem:[%s1 + $0x98] sm:$0xff]
    %v40 = vld [vmem:[%s1 + $0xa0] sm:$0xff]
    %v41 = vld [vmem:[%s1 + $0xa8] sm:$0xff]
    %v42 = vld [vmem:[%s1 + $0xb0] sm:$0xff]
    %v43 = vld [vmem:[%s1 + $0xb8] sm:$0xff]
    %v44 = vld [vmem:[%s1 + $0xc0] sm:$0xff]
    %v45 = vld [vmem:[%s1 + $0xc8] sm:$0xff]
    %v46 = vld [vmem:[%s1 + $0xd0] sm:$0xff]
    %v47 = vld [vmem:[%s1 + $0xd8] sm:$0xff]
    %v48 = vld [vmem:[%s1 + $0xe0] sm:$0xff]
    %v49 = vld [vmem:[%s1 + $0xe8] sm:$0xff]
    %v50 = vld [vmem:[%s1 + $0xf0] sm:$0xff]
    %v51 = vld [vmem:[%s1 + $0xf8] sm:$0xff]
    %v52 = vld [vmem:[%s2] sm:$0xff]
    %v53 = vld [vmem:[%s2 + $0x8] sm:$0xff]
    %v54 = vld [vmem:[%s2 + $0x10] sm:$0xff]
    %v55 = vld [vmem:[%s2 + $0x18] sm:$0xff]
    %v56 = vld [vmem:[%s2 + $0x20] sm:$0xff]
    %v57 = vld [vmem:[%s2 + $0x28] sm:$0xff]
    %v58 = vld [vmem:[%s2 + $0x30] sm:$0xff]
    %v59 = vld [vmem:[%s2 + $0x38] sm:$0xff]
    %vm60 = vcmask 523264
    %v62 = vsel %vm60, %v18, 0
    %64 = vmatprep.subr.mxu0 0.0
    %65 = vmatpush1.msra.mxu0 0.0
    %66 = vmatprep.subr.mxu0 0.0
    %67 = vmatpush1.msra.mxu0 0.0
    %68 = vmatprep.subr.mxu0 0.0
    %69 = vmatpush1.msra.mxu0 0.0
    %70 = vmatprep.subr.mxu0 0.0
    %71 = vmatpush1.msra.mxu0 0.0
    %72 = vmatprep.subr.mxu0 0.0
    %73 = vmatpush1.msra.mxu0 0.0
    %74 = vmatprep.subr.mxu0 0.0
    %75 = vmatpush1.msra.mxu0 0.0
    %76 = vmatprep.subr.mxu0 0.0
    %77 = vmatpush1.msra.mxu0 0.0
    %78 = vmatprep.subr.mxu0 0.0
    %79 = vmatpush1.msra.mxu0 0.0
    %80 = vmatprep.subr.mxu0 0.0
    %81 = vmatpush1.msra.mxu0 %v27
    %82 = vmatprep.subr.mxu0 0.0
    %83 = vmatpush1.msra.mxu0 %v26
    %84 = vmatprep.subr.mxu0 0.0
    %85 = vmatpush1.msra.mxu0 %v25
    %86 = vmatprep.subr.mxu0 0.0
    %87 = vmatpush1.msra.mxu0 %v24
    %88 = vmatprep.subr.mxu0 0.0
    %89 = vmatpush1.msra.mxu0 %v23
    %90 = vmatprep.subr.mxu0 0.0
    %91 = vmatpush1.msra.mxu0 %v22
    %92 = vmatprep.subr.mxu0 0.0
    %93 = vmatpush1.msra.mxu0 %v21
    %94 = vmatprep.subr.mxu0 0.0
    %95 = vmatpush1.msra.mxu0 %v20
    %96 = vmatprep.subr.mxu0 0.0
    %97 = vmatpush2.msra.mxu0 0.0
    %98 = vmatprep.subr.mxu0 0.0
    %99 = vmatpush2.msra.mxu0 0.0
    %100 = vmatprep.subr.mxu0 0.0
    %101 = vmatpush2.msra.mxu0 0.0
    %102 = vmatprep.subr.mxu0 0.0
    %103 = vmatpush2.msra.mxu0 0.0
    %104 = vmatprep.subr.mxu0 0.0
    %105 = vmatpush2.msra.mxu0 0.0
    %106 = vmatprep.subr.mxu0 0.0
    %107 = vmatpush2.msra.mxu0 0.0
    %108 = vmatprep.subr.mxu0 0.0
    %109 = vmatpush2.msra.mxu0 0.0
    %110 = vmatprep.subr.mxu0 0.0
    %111 = vmatpush2.msra.mxu0 0.0
    %112 = vmatprep.subr.mxu0 0.0
    %113 = vmatpush2.msra.mxu0 0.0
    %114 = vmatprep.subr.mxu0 0.0
    %115 = vmatpush2.msra.mxu0 0.0
    %116 = vmatprep.subr.mxu0 0.0
    %117 = vmatpush2.msra.mxu0 0.0
    %118 = vmatprep.subr.mxu0 0.0
    %119 = vmatpush2.msra.mxu0 0.0
    %120 = vmatprep.subr.mxu0 0.0
    %121 = vmatpush2.msra.mxu0 0.0
    %122 = vmatprep.subr.mxu0 0.0
    %123 = vmatpush2.msra.mxu0 0.0
    %124 = vmatprep.subr.mxu0 0.0
    %125 = vmatpush2.msra.mxu0 0.0
    %126 = vmatprep.subr.mxu0 0.0
    %127 = vmatpush2.msra.mxu0 0.0
    %128 = vmatprep.mubr.f32.mxu0 0.0
    %129 = vmatmul.mubr.f32.gmra.mxu0 %v62
    %v130 = vpop.f32.mrf.mxu0
    %v131 = vadd.f32 0.0, %v130
    %v132 = vpop.f32.mrf.mxu0
    %133 = vdwg.mxu0
    %134 = vmatprep.subr.mxu0 0.0
    %135 = vmatpush1.msra.mxu0 0.0
    %136 = vmatprep.subr.mxu0 0.0
    %137 = vmatpush1.msra.mxu0 0.0
    %138 = vmatprep.subr.mxu0 0.0
    %139 = vmatpush1.msra.mxu0 0.0
    %140 = vmatprep.subr.mxu0 0.0
    %141 = vmatpush1.msra.mxu0 0.0
    %142 = vmatprep.subr.mxu0 0.0
    %143 = vmatpush1.msra.mxu0 0.0
    %144 = vmatprep.subr.mxu0 0.0
    %145 = vmatpush1.msra.mxu0 0.0
    %146 = vmatprep.subr.mxu0 0.0
    %147 = vmatpush1.msra.mxu0 0.0
    %148 = vmatprep.subr.mxu0 0.0
    %149 = vmatpush1.msra.mxu0 0.0
    %150 = vmatprep.subr.mxu0 0.0
    %151 = vmatpush1.msra.mxu0 %v35
    %152 = vmatprep.subr.mxu0 0.0
    %153 = vmatpush1.msra.mxu0 %v34
    %154 = vmatprep.subr.mxu0 0.0
    %155 = vmatpush1.msra.mxu0 %v33
    %156 = vmatprep.subr.mxu0 0.0
    %157 = vmatpush1.msra.mxu0 %v32
    %158 = vmatprep.subr.mxu0 0.0
    %159 = vmatpush1.msra.mxu0 %v31
    %160 = vmatprep.subr.mxu0 0.0
    %161 = vmatpush1.msra.mxu0 %v30
    %162 = vmatprep.subr.mxu0 0.0
    %163 = vmatpush1.msra.mxu0 %v29
    %164 = vmatprep.subr.mxu0 0.0
    %165 = vmatpush1.msra.mxu0 %v28
    %166 = vmatprep.subr.mxu0 0.0
    %167 = vmatpush2.msra.mxu0 0.0
    %168 = vmatprep.subr.mxu0 0.0
    %169 = vmatpush2.msra.mxu0 0.0
    %170 = vmatprep.subr.mxu0 0.0
    %171 = vmatpush2.msra.mxu0 0.0
    %172 = vmatprep.subr.mxu0 0.0
    %173 = vmatpush2.msra.mxu0 0.0
    %174 = vmatprep.subr.mxu0 0.0
    %175 = vmatpush2.msra.mxu0 0.0
    %176 = vmatprep.subr.mxu0 0.0
    %177 = vmatpush2.msra.mxu0 0.0
    %178 = vmatprep.subr.mxu0 0.0
    %179 = vmatpush2.msra.mxu0 0.0
    %180 = vmatprep.subr.mxu0 0.0
    %181 = vmatpush2.msra.mxu0 0.0
    %182 = vmatprep.subr.mxu0 0.0
    %183 = vmatpush2.msra.mxu0 0.0
    %184 = vmatprep.subr.mxu0 0.0
    %185 = vmatpush2.msra.mxu0 0.0
    %186 = vmatprep.subr.mxu0 0.0
    %187 = vmatpush2.msra.mxu0 0.0
    %188 = vmatprep.subr.mxu0 0.0
    %189 = vmatpush2.msra.mxu0 0.0
    %190 = vmatprep.subr.mxu0 0.0
    %191 = vmatpush2.msra.mxu0 0.0
    %192 = vmatprep.subr.mxu0 0.0
    %193 = vmatpush2.msra.mxu0 0.0
    %194 = vmatprep.subr.mxu0 0.0
    %195 = vmatpush2.msra.mxu0 0.0
    %196 = vmatprep.subr.mxu0 0.0
    %197 = vmatpush2.msra.mxu0 0.0
    %198 = vmatprep.mubr.f32.mxu0 0.0
    %199 = vmatmul.mubr.f32.gmra.mxu0 %v62
    %v200 = vpop.f32.mrf.mxu0
    %v201 = vadd.f32 0.0, %v200
    %v202 = vpop.f32.mrf.mxu0
    %203 = vdwg.mxu0
    %204 = vmatprep.subr.mxu0 0.0
    %205 = vmatpush1.msra.mxu0 0.0
    %206 = vmatprep.subr.mxu0 0.0
    %207 = vmatpush1.msra.mxu0 0.0
    %208 = vmatprep.subr.mxu0 0.0
    %209 = vmatpush1.msra.mxu0 0.0
    %210 = vmatprep.subr.mxu0 0.0
    %211 = vmatpush1.msra.mxu0 0.0
    %212 = vmatprep.subr.mxu0 0.0
    %213 = vmatpush1.msra.mxu0 0.0
    %214 = vmatprep.subr.mxu0 0.0
    %215 = vmatpush1.msra.mxu0 0.0
    %216 = vmatprep.subr.mxu0 0.0
    %217 = vmatpush1.msra.mxu0 0.0
    %218 = vmatprep.subr.mxu0 0.0
    %219 = vmatpush1.msra.mxu0 0.0
    %220 = vmatprep.subr.mxu0 0.0
    %221 = vmatpush1.msra.mxu0 %v43
    %222 = vmatprep.subr.mxu0 0.0
    %223 = vmatpush1.msra.mxu0 %v42
    %224 = vmatprep.subr.mxu0 0.0
    %225 = vmatpush1.msra.mxu0 %v41
    %226 = vmatprep.subr.mxu0 0.0
    %227 = vmatpush1.msra.mxu0 %v40
    %228 = vmatprep.subr.mxu0 0.0
    %229 = vmatpush1.msra.mxu0 %v39
    %230 = vmatprep.subr.mxu0 0.0
    %231 = vmatpush1.msra.mxu0 %v38
    %232 = vmatprep.subr.mxu0 0.0
    %233 = vmatpush1.msra.mxu0 %v37
    %234 = vmatprep.subr.mxu0 0.0
    %235 = vmatpush1.msra.mxu0 %v36
    %236 = vmatprep.subr.mxu0 0.0
    %237 = vmatpush2.msra.mxu0 0.0
    %238 = vmatprep.subr.mxu0 0.0
    %239 = vmatpush2.msra.mxu0 0.0
    %240 = vmatprep.subr.mxu0 0.0
    %241 = vmatpush2.msra.mxu0 0.0
    %242 = vmatprep.subr.mxu0 0.0
    %243 = vmatpush2.msra.mxu0 0.0
    %244 = vmatprep.subr.mxu0 0.0
    %245 = vmatpush2.msra.mxu0 0.0
    %246 = vmatprep.subr.mxu0 0.0
    %247 = vmatpush2.msra.mxu0 0.0
    %248 = vmatprep.subr.mxu0 0.0
    %249 = vmatpush2.msra.mxu0 0.0
    %250 = vmatprep.subr.mxu0 0.0
    %251 = vmatpush2.msra.mxu0 0.0
    %252 = vmatprep.subr.mxu0 0.0
    %253 = vmatpush2.msra.mxu0 0.0
    %254 = vmatprep.subr.mxu0 0.0
    %255 = vmatpush2.msra.mxu0 0.0
    %256 = vmatprep.subr.mxu0 0.0
    %257 = vmatpush2.msra.mxu0 0.0
    %258 = vmatprep.subr.mxu0 0.0
    %259 = vmatpush2.msra.mxu0 0.0
    %260 = vmatprep.subr.mxu0 0.0
    %261 = vmatpush2.msra.mxu0 0.0
    %262 = vmatprep.subr.mxu0 0.0
    %263 = vmatpush2.msra.mxu0 0.0
    %264 = vmatprep.subr.mxu0 0.0
    %265 = vmatpush2.msra.mxu0 0.0
    %266 = vmatprep.subr.mxu0 0.0
    %267 = vmatpush2.msra.mxu0 0.0
    %268 = vmatprep.mubr.f32.mxu0 0.0
    %269 = vmatmul.mubr.f32.gmra.mxu0 %v62
    %v270 = vpop.f32.mrf.mxu0
    %v271 = vadd.f32 0.0, %v270
    %v272 = vpop.f32.mrf.mxu0
    %273 = vdwg.mxu0
    %274 = vmatprep.subr.mxu0 0.0
    %275 = vmatpush1.msra.mxu0 0.0
    %276 = vmatprep.subr.mxu0 0.0
    %277 = vmatpush1.msra.mxu0 0.0
    %278 = vmatprep.subr.mxu0 0.0
    %279 = vmatpush1.msra.mxu0 0.0
    %280 = vmatprep.subr.mxu0 0.0
    %281 = vmatpush1.msra.mxu0 0.0
    %282 = vmatprep.subr.mxu0 0.0
    %283 = vmatpush1.msra.mxu0 0.0
    %284 = vmatprep.subr.mxu0 0.0
    %285 = vmatpush1.msra.mxu0 0.0
    %286 = vmatprep.subr.mxu0 0.0
    %287 = vmatpush1.msra.mxu0 0.0
    %288 = vmatprep.subr.mxu0 0.0
    %289 = vmatpush1.msra.mxu0 0.0
    %290 = vmatprep.subr.mxu0 0.0
    %291 = vmatpush1.msra.mxu0 %v51
    %292 = vmatprep.subr.mxu0 0.0
    %293 = vmatpush1.msra.mxu0 %v50
    %294 = vmatprep.subr.mxu0 0.0
    %295 = vmatpush1.msra.mxu0 %v49
    %296 = vmatprep.subr.mxu0 0.0
    %297 = vmatpush1.msra.mxu0 %v48
    %298 = vmatprep.subr.mxu0 0.0
    %299 = vmatpush1.msra.mxu0 %v47
    %300 = vmatprep.subr.mxu0 0.0
    %301 = vmatpush1.msra.mxu0 %v46
    %302 = vmatprep.subr.mxu0 0.0
    %303 = vmatpush1.msra.mxu0 %v45
    %304 = vmatprep.subr.mxu0 0.0
    %305 = vmatpush1.msra.mxu0 %v44
    %306 = vmatprep.subr.mxu0 0.0
    %307 = vmatpush2.msra.mxu0 0.0
    %308 = vmatprep.subr.mxu0 0.0
    %309 = vmatpush2.msra.mxu0 0.0
    %310 = vmatprep.subr.mxu0 0.0
    %311 = vmatpush2.msra.mxu0 0.0
    %312 = vmatprep.subr.mxu0 0.0
    %313 = vmatpush2.msra.mxu0 0.0
    %314 = vmatprep.subr.mxu0 0.0
    %315 = vmatpush2.msra.mxu0 0.0
    %316 = vmatprep.subr.mxu0 0.0
    %317 = vmatpush2.msra.mxu0 0.0
    %318 = vmatprep.subr.mxu0 0.0
    %319 = vmatpush2.msra.mxu0 0.0
    %320 = vmatprep.subr.mxu0 0.0
    %321 = vmatpush2.msra.mxu0 0.0
    %322 = vmatprep.subr.mxu0 0.0
    %323 = vmatpush2.msra.mxu0 0.0
    %324 = vmatprep.subr.mxu0 0.0
    %325 = vmatpush2.msra.mxu0 0.0
    %326 = vmatprep.subr.mxu0 0.0
    %327 = vmatpush2.msra.mxu0 0.0
    %328 = vmatprep.subr.mxu0 0.0
    %329 = vmatpush2.msra.mxu0 0.0
    %330 = vmatprep.subr.mxu0 0.0
    %331 = vmatpush2.msra.mxu0 0.0
    %332 = vmatprep.subr.mxu0 0.0
    %333 = vmatpush2.msra.mxu0 0.0
    %334 = vmatprep.subr.mxu0 0.0
    %335 = vmatpush2.msra.mxu0 0.0
    %336 = vmatprep.subr.mxu0 0.0
    %337 = vmatpush2.msra.mxu0 0.0
    %338 = vmatprep.mubr.f32.mxu0 0.0
    %339 = vmatmul.mubr.f32.gmra.mxu0 %v62
    %v340 = vpop.f32.mrf.mxu0
    %v341 = vadd.f32 0.0, %v340
    %v342 = vpop.f32.mrf.mxu0
    %343 = vdwg.mxu0
    %v345 = vsel %vm60, %v19, 0
    %347 = vmatprep.subr.mxu0 0.0
    %348 = vmatpush1.msra.mxu0 0.0
    %349 = vmatprep.subr.mxu0 0.0
    %350 = vmatpush1.msra.mxu0 0.0
    %351 = vmatprep.subr.mxu0 0.0
    %352 = vmatpush1.msra.mxu0 0.0
    %353 = vmatprep.subr.mxu0 0.0
    %354 = vmatpush1.msra.mxu0 0.0
    %355 = vmatprep.subr.mxu0 0.0
    %356 = vmatpush1.msra.mxu0 0.0
    %357 = vmatprep.subr.mxu0 0.0
    %358 = vmatpush1.msra.mxu0 0.0
    %359 = vmatprep.subr.mxu0 0.0
    %360 = vmatpush1.msra.mxu0 0.0
    %361 = vmatprep.subr.mxu0 0.0
    %362 = vmatpush1.msra.mxu0 0.0
    %363 = vmatprep.subr.mxu0 0.0
    %364 = vmatpush1.msra.mxu0 %v27
    %365 = vmatprep.subr.mxu0 0.0
    %366 = vmatpush1.msra.mxu0 %v26
    %367 = vmatprep.subr.mxu0 0.0
    %368 = vmatpush1.msra.mxu0 %v25
    %369 = vmatprep.subr.mxu0 0.0
    %370 = vmatpush1.msra.mxu0 %v24
    %371 = vmatprep.subr.mxu0 0.0
    %372 = vmatpush1.msra.mxu0 %v23
    %373 = vmatprep.subr.mxu0 0.0
    %374 = vmatpush1.msra.mxu0 %v22
    %375 = vmatprep.subr.mxu0 0.0
    %376 = vmatpush1.msra.mxu0 %v21
    %377 = vmatprep.subr.mxu0 0.0
    %378 = vmatpush1.msra.mxu0 %v20
    %379 = vmatprep.subr.mxu0 0.0
    %380 = vmatpush2.msra.mxu0 0.0
    %381 = vmatprep.subr.mxu0 0.0
    %382 = vmatpush2.msra.mxu0 0.0
    %383 = vmatprep.subr.mxu0 0.0
    %384 = vmatpush2.msra.mxu0 0.0
    %385 = vmatprep.subr.mxu0 0.0
    %386 = vmatpush2.msra.mxu0 0.0
    %387 = vmatprep.subr.mxu0 0.0
    %388 = vmatpush2.msra.mxu0 0.0
    %389 = vmatprep.subr.mxu0 0.0
    %390 = vmatpush2.msra.mxu0 0.0
    %391 = vmatprep.subr.mxu0 0.0
    %392 = vmatpush2.msra.mxu0 0.0
    %393 = vmatprep.subr.mxu0 0.0
    %394 = vmatpush2.msra.mxu0 0.0
    %395 = vmatprep.subr.mxu0 0.0
    %396 = vmatpush2.msra.mxu0 0.0
    %397 = vmatprep.subr.mxu0 0.0
    %398 = vmatpush2.msra.mxu0 0.0
    %399 = vmatprep.subr.mxu0 0.0
    %400 = vmatpush2.msra.mxu0 0.0
    %401 = vmatprep.subr.mxu0 0.0
    %402 = vmatpush2.msra.mxu0 0.0
    %403 = vmatprep.subr.mxu0 0.0
    %404 = vmatpush2.msra.mxu0 0.0
    %405 = vmatprep.subr.mxu0 0.0
    %406 = vmatpush2.msra.mxu0 0.0
    %407 = vmatprep.subr.mxu0 0.0
    %408 = vmatpush2.msra.mxu0 0.0
    %409 = vmatprep.subr.mxu0 0.0
    %410 = vmatpush2.msra.mxu0 0.0
    %411 = vmatprep.mubr.f32.mxu0 0.0
    %412 = vmatmul.mubr.f32.gmra.mxu0 %v345
    %v413 = vpop.f32.mrf.mxu0
    %v414 = vadd.f32 0.0, %v413
    %v415 = vpop.f32.mrf.mxu0
    %416 = vdwg.mxu0
    %417 = vmatprep.subr.mxu0 0.0
    %418 = vmatpush1.msra.mxu0 0.0
    %419 = vmatprep.subr.mxu0 0.0
    %420 = vmatpush1.msra.mxu0 0.0
    %421 = vmatprep.subr.mxu0 0.0
    %422 = vmatpush1.msra.mxu0 0.0
    %423 = vmatprep.subr.mxu0 0.0
    %424 = vmatpush1.msra.mxu0 0.0
    %425 = vmatprep.subr.mxu0 0.0
    %426 = vmatpush1.msra.mxu0 0.0
    %427 = vmatprep.subr.mxu0 0.0
    %428 = vmatpush1.msra.mxu0 0.0
    %429 = vmatprep.subr.mxu0 0.0
    %430 = vmatpush1.msra.mxu0 0.0
    %431 = vmatprep.subr.mxu0 0.0
    %432 = vmatpush1.msra.mxu0 0.0
    %433 = vmatprep.subr.mxu0 0.0
    %434 = vmatpush1.msra.mxu0 %v35
    %435 = vmatprep.subr.mxu0 0.0
    %436 = vmatpush1.msra.mxu0 %v34
    %437 = vmatprep.subr.mxu0 0.0
    %438 = vmatpush1.msra.mxu0 %v33
    %439 = vmatprep.subr.mxu0 0.0
    %440 = vmatpush1.msra.mxu0 %v32
    %441 = vmatprep.subr.mxu0 0.0
    %442 = vmatpush1.msra.mxu0 %v31
    %443 = vmatprep.subr.mxu0 0.0
    %444 = vmatpush1.msra.mxu0 %v30
    %445 = vmatprep.subr.mxu0 0.0
    %446 = vmatpush1.msra.mxu0 %v29
    %447 = vmatprep.subr.mxu0 0.0
    %448 = vmatpush1.msra.mxu0 %v28
    %449 = vmatprep.subr.mxu0 0.0
    %450 = vmatpush2.msra.mxu0 0.0
    %451 = vmatprep.subr.mxu0 0.0
    %452 = vmatpush2.msra.mxu0 0.0
    %453 = vmatprep.subr.mxu0 0.0
    %454 = vmatpush2.msra.mxu0 0.0
    %455 = vmatprep.subr.mxu0 0.0
    %456 = vmatpush2.msra.mxu0 0.0
    %457 = vmatprep.subr.mxu0 0.0
    %458 = vmatpush2.msra.mxu0 0.0
    %459 = vmatprep.subr.mxu0 0.0
    %460 = vmatpush2.msra.mxu0 0.0
    %461 = vmatprep.subr.mxu0 0.0
    %462 = vmatpush2.msra.mxu0 0.0
    %463 = vmatprep.subr.mxu0 0.0
    %464 = vmatpush2.msra.mxu0 0.0
    %465 = vmatprep.subr.mxu0 0.0
    %466 = vmatpush2.msra.mxu0 0.0
    %467 = vmatprep.subr.mxu0 0.0
    %468 = vmatpush2.msra.mxu0 0.0
    %469 = vmatprep.subr.mxu0 0.0
    %470 = vmatpush2.msra.mxu0 0.0
    %471 = vmatprep.subr.mxu0 0.0
    %472 = vmatpush2.msra.mxu0 0.0
    %473 = vmatprep.subr.mxu0 0.0
    %474 = vmatpush2.msra.mxu0 0.0
    %475 = vmatprep.subr.mxu0 0.0
    %476 = vmatpush2.msra.mxu0 0.0
    %477 = vmatprep.subr.mxu0 0.0
    %478 = vmatpush2.msra.mxu0 0.0
    %479 = vmatprep.subr.mxu0 0.0
    %480 = vmatpush2.msra.mxu0 0.0
    %481 = vmatprep.mubr.f32.mxu0 0.0
    %482 = vmatmul.mubr.f32.gmra.mxu0 %v345
    %v483 = vpop.f32.mrf.mxu0
    %v484 = vadd.f32 0.0, %v483
    %v485 = vpop.f32.mrf.mxu0
    %486 = vdwg.mxu0
    %487 = vmatprep.subr.mxu0 0.0
    %488 = vmatpush1.msra.mxu0 0.0
    %489 = vmatprep.subr.mxu0 0.0
    %490 = vmatpush1.msra.mxu0 0.0
    %491 = vmatprep.subr.mxu0 0.0
    %492 = vmatpush1.msra.mxu0 0.0
    %493 = vmatprep.subr.mxu0 0.0
    %494 = vmatpush1.msra.mxu0 0.0
    %495 = vmatprep.subr.mxu0 0.0
    %496 = vmatpush1.msra.mxu0 0.0
    %497 = vmatprep.subr.mxu0 0.0
    %498 = vmatpush1.msra.mxu0 0.0
    %499 = vmatprep.subr.mxu0 0.0
    %500 = vmatpush1.msra.mxu0 0.0
    %501 = vmatprep.subr.mxu0 0.0
    %502 = vmatpush1.msra.mxu0 0.0
    %503 = vmatprep.subr.mxu0 0.0
    %504 = vmatpush1.msra.mxu0 %v43
    %505 = vmatprep.subr.mxu0 0.0
    %506 = vmatpush1.msra.mxu0 %v42
    %507 = vmatprep.subr.mxu0 0.0
    %508 = vmatpush1.msra.mxu0 %v41
    %509 = vmatprep.subr.mxu0 0.0
    %510 = vmatpush1.msra.mxu0 %v40
    %511 = vmatprep.subr.mxu0 0.0
    %512 = vmatpush1.msra.mxu0 %v39
    %513 = vmatprep.subr.mxu0 0.0
    %514 = vmatpush1.msra.mxu0 %v38
    %515 = vmatprep.subr.mxu0 0.0
    %516 = vmatpush1.msra.mxu0 %v37
    %517 = vmatprep.subr.mxu0 0.0
    %518 = vmatpush1.msra.mxu0 %v36
    %519 = vmatprep.subr.mxu0 0.0
    %520 = vmatpush2.msra.mxu0 0.0
    %521 = vmatprep.subr.mxu0 0.0
    %522 = vmatpush2.msra.mxu0 0.0
    %523 = vmatprep.subr.mxu0 0.0
    %524 = vmatpush2.msra.mxu0 0.0
    %525 = vmatprep.subr.mxu0 0.0
    %526 = vmatpush2.msra.mxu0 0.0
    %527 = vmatprep.subr.mxu0 0.0
    %528 = vmatpush2.msra.mxu0 0.0
    %529 = vmatprep.subr.mxu0 0.0
    %530 = vmatpush2.msra.mxu0 0.0
    %531 = vmatprep.subr.mxu0 0.0
    %532 = vmatpush2.msra.mxu0 0.0
    %533 = vmatprep.subr.mxu0 0.0
    %534 = vmatpush2.msra.mxu0 0.0
    %535 = vmatprep.subr.mxu0 0.0
    %536 = vmatpush2.msra.mxu0 0.0
    %537 = vmatprep.subr.mxu0 0.0
    %538 = vmatpush2.msra.mxu0 0.0
    %539 = vmatprep.subr.mxu0 0.0
    %540 = vmatpush2.msra.mxu0 0.0
    %541 = vmatprep.subr.mxu0 0.0
    %542 = vmatpush2.msra.mxu0 0.0
    %543 = vmatprep.subr.mxu0 0.0
    %544 = vmatpush2.msra.mxu0 0.0
    %545 = vmatprep.subr.mxu0 0.0
    %546 = vmatpush2.msra.mxu0 0.0
    %547 = vmatprep.subr.mxu0 0.0
    %548 = vmatpush2.msra.mxu0 0.0
    %549 = vmatprep.subr.mxu0 0.0
    %550 = vmatpush2.msra.mxu0 0.0
    %551 = vmatprep.mubr.f32.mxu0 0.0
    %552 = vmatmul.mubr.f32.gmra.mxu0 %v345
    %v553 = vpop.f32.mrf.mxu0
    %v554 = vadd.f32 0.0, %v553
    %v555 = vpop.f32.mrf.mxu0
    %556 = vdwg.mxu0
    %557 = vmatprep.subr.mxu0 0.0
    %558 = vmatpush1.msra.mxu0 0.0
    %559 = vmatprep.subr.mxu0 0.0
    %560 = vmatpush1.msra.mxu0 0.0
    %561 = vmatprep.subr.mxu0 0.0
    %562 = vmatpush1.msra.mxu0 0.0
    %563 = vmatprep.subr.mxu0 0.0
    %564 = vmatpush1.msra.mxu0 0.0
    %565 = vmatprep.subr.mxu0 0.0
    %566 = vmatpush1.msra.mxu0 0.0
    %567 = vmatprep.subr.mxu0 0.0
    %568 = vmatpush1.msra.mxu0 0.0
    %569 = vmatprep.subr.mxu0 0.0
    %570 = vmatpush1.msra.mxu0 0.0
    %571 = vmatprep.subr.mxu0 0.0
    %572 = vmatpush1.msra.mxu0 0.0
    %573 = vmatprep.subr.mxu0 0.0
    %574 = vmatpush1.msra.mxu0 %v51
    %575 = vmatprep.subr.mxu0 0.0
    %576 = vmatpush1.msra.mxu0 %v50
    %577 = vmatprep.subr.mxu0 0.0
    %578 = vmatpush1.msra.mxu0 %v49
    %579 = vmatprep.subr.mxu0 0.0
    %580 = vmatpush1.msra.mxu0 %v48
    %581 = vmatprep.subr.mxu0 0.0
    %582 = vmatpush1.msra.mxu0 %v47
    %583 = vmatprep.subr.mxu0 0.0
    %584 = vmatpush1.msra.mxu0 %v46
    %585 = vmatprep.subr.mxu0 0.0
    %586 = vmatpush1.msra.mxu0 %v45
    %587 = vmatprep.subr.mxu0 0.0
    %588 = vmatpush1.msra.mxu0 %v44
    %589 = vmatprep.subr.mxu0 0.0
    %590 = vmatpush2.msra.mxu0 0.0
    %591 = vmatprep.subr.mxu0 0.0
    %592 = vmatpush2.msra.mxu0 0.0
    %593 = vmatprep.subr.mxu0 0.0
    %594 = vmatpush2.msra.mxu0 0.0
    %595 = vmatprep.subr.mxu0 0.0
    %596 = vmatpush2.msra.mxu0 0.0
    %597 = vmatprep.subr.mxu0 0.0
    %598 = vmatpush2.msra.mxu0 0.0
    %599 = vmatprep.subr.mxu0 0.0
    %600 = vmatpush2.msra.mxu0 0.0
    %601 = vmatprep.subr.mxu0 0.0
    %602 = vmatpush2.msra.mxu0 0.0
    %603 = vmatprep.subr.mxu0 0.0
    %604 = vmatpush2.msra.mxu0 0.0
    %605 = vmatprep.subr.mxu0 0.0
    %606 = vmatpush2.msra.mxu0 0.0
    %607 = vmatprep.subr.mxu0 0.0
    %608 = vmatpush2.msra.mxu0 0.0
    %609 = vmatprep.subr.mxu0 0.0
    %610 = vmatpush2.msra.mxu0 0.0
    %611 = vmatprep.subr.mxu0 0.0
    %612 = vmatpush2.msra.mxu0 0.0
    %613 = vmatprep.subr.mxu0 0.0
    %614 = vmatpush2.msra.mxu0 0.0
    %615 = vmatprep.subr.mxu0 0.0
    %616 = vmatpush2.msra.mxu0 0.0
    %617 = vmatprep.subr.mxu0 0.0
    %618 = vmatpush2.msra.mxu0 0.0
    %619 = vmatprep.subr.mxu0 0.0
    %620 = vmatpush2.msra.mxu0 0.0
    %621 = vmatprep.mubr.f32.mxu0 0.0
    %622 = vmatmul.mubr.f32.gmra.mxu0 %v345
    %v623 = vpop.f32.mrf.mxu0
    %v624 = vadd.f32 0.0, %v623
    %v625 = vpop.f32.mrf.mxu0
    %626 = vdwg.mxu0
    %v627 = vlaneseq
    %v628 = vshrl.u32 %v627, 7
    %v629 = vlaneseq
    %v630 = vand.u32 %v629, 127
    %vm631 = vcmp.le.s32.totalorder %v630, %v628
    %v632 = vsel %vm631, 0.0, -1e+30
    %634 = vrot.lane.b32.xlu0 %v131, 112
    %v635 = vpop.permute.xlu0 %634
    %vm636 = vcmask 130048
    %v637 = vsel %vm636, %v131, 0
    %v639 = vsel %vm636, %v635, 0
    %641 = vmatprep.subr.mxu0 0.0
    %642 = vmatpush1.xpose.msra.mxu0 0.0
    %643 = vmatprep.subr.mxu0 0.0
    %644 = vmatpush1.xpose.msra.mxu0 0.0
    %645 = vmatprep.subr.mxu0 0.0
    %646 = vmatpush1.xpose.msra.mxu0 0.0
    %647 = vmatprep.subr.mxu0 0.0
    %648 = vmatpush1.xpose.msra.mxu0 0.0
    %649 = vmatprep.subr.mxu0 0.0
    %650 = vmatpush1.xpose.msra.mxu0 0.0
    %651 = vmatprep.subr.mxu0 0.0
    %652 = vmatpush1.xpose.msra.mxu0 0.0
    %653 = vmatprep.subr.mxu0 0.0
    %654 = vmatpush1.xpose.msra.mxu0 0.0
    %655 = vmatprep.subr.mxu0 0.0
    %656 = vmatpush1.xpose.msra.mxu0 0.0
    %657 = vmatprep.subr.mxu0 0.0
    %658 = vmatpush1.xpose.msra.mxu0 0.0
    %659 = vmatprep.subr.mxu0 0.0
    %660 = vmatpush1.xpose.msra.mxu0 0.0
    %661 = vmatprep.subr.mxu0 0.0
    %662 = vmatpush1.xpose.msra.mxu0 0.0
    %663 = vmatprep.subr.mxu0 0.0
    %664 = vmatpush1.xpose.msra.mxu0 0.0
    %665 = vmatprep.subr.mxu0 0.0
    %666 = vmatpush1.xpose.msra.mxu0 0.0
    %667 = vmatprep.subr.mxu0 0.0
    %668 = vmatpush1.xpose.msra.mxu0 0.0
    %669 = vmatprep.subr.mxu0 0.0
    %670 = vmatpush1.xpose.msra.mxu0 0.0
    %671 = vmatprep.subr.mxu0 0.0
    %672 = vmatpush1.xpose.msra.mxu0 %v639
    %673 = vmatprep.subr.mxu0 0.0
    %674 = vmatpush2.xpose.msra.mxu0 0.0
    %675 = vmatprep.subr.mxu0 0.0
    %676 = vmatpush2.xpose.msra.mxu0 0.0
    %677 = vmatprep.subr.mxu0 0.0
    %678 = vmatpush2.xpose.msra.mxu0 0.0
    %679 = vmatprep.subr.mxu0 0.0
    %680 = vmatpush2.xpose.msra.mxu0 0.0
    %681 = vmatprep.subr.mxu0 0.0
    %682 = vmatpush2.xpose.msra.mxu0 0.0
    %683 = vmatprep.subr.mxu0 0.0
    %684 = vmatpush2.xpose.msra.mxu0 0.0
    %685 = vmatprep.subr.mxu0 0.0
    %686 = vmatpush2.xpose.msra.mxu0 0.0
    %687 = vmatprep.subr.mxu0 0.0
    %688 = vmatpush2.xpose.msra.mxu0 0.0
    %689 = vmatprep.subr.mxu0 0.0
    %690 = vmatpush2.xpose.msra.mxu0 0.0
    %691 = vmatprep.subr.mxu0 0.0
    %692 = vmatpush2.xpose.msra.mxu0 0.0
    %693 = vmatprep.subr.mxu0 0.0
    %694 = vmatpush2.xpose.msra.mxu0 0.0
    %695 = vmatprep.subr.mxu0 0.0
    %696 = vmatpush2.xpose.msra.mxu0 0.0
    %697 = vmatprep.subr.mxu0 0.0
    %698 = vmatpush2.xpose.msra.mxu0 0.0
    %699 = vmatprep.subr.mxu0 0.0
    %700 = vmatpush2.xpose.msra.mxu0 0.0
    %701 = vmatprep.subr.mxu0 0.0
    %702 = vmatpush2.xpose.msra.mxu0 0.0
    %703 = vmatprep.subr.mxu0 0.0
    %704 = vmatpush2.xpose.msra.mxu0 0.0
    %705 = vmatprep.mubr.f32.mxu0 0.0
    %706 = vmatmul.mubr.f32.gmra.mxu0 %v637
    %v707 = vpop.f32.mrf.mxu0
    %v708 = vadd.f32 0.0, %v707
    %v709 = vpop.f32.mrf.mxu0
    %710 = vdwg.mxu0
    %712 = vrot.lane.b32.xlu0 %v201, 112
    %v713 = vpop.permute.xlu0 %712
    %v714 = vsel %vm636, %v201, 0
    %v716 = vsel %vm636, %v713, 0
    %718 = vmatprep.subr.mxu0 0.0
    %719 = vmatpush1.xpose.msra.mxu0 0.0
    %720 = vmatprep.subr.mxu0 0.0
    %721 = vmatpush1.xpose.msra.mxu0 0.0
    %722 = vmatprep.subr.mxu0 0.0
    %723 = vmatpush1.xpose.msra.mxu0 0.0
    %724 = vmatprep.subr.mxu0 0.0
    %725 = vmatpush1.xpose.msra.mxu0 0.0
    %726 = vmatprep.subr.mxu0 0.0
    %727 = vmatpush1.xpose.msra.mxu0 0.0
    %728 = vmatprep.subr.mxu0 0.0
    %729 = vmatpush1.xpose.msra.mxu0 0.0
    %730 = vmatprep.subr.mxu0 0.0
    %731 = vmatpush1.xpose.msra.mxu0 0.0
    %732 = vmatprep.subr.mxu0 0.0
    %733 = vmatpush1.xpose.msra.mxu0 0.0
    %734 = vmatprep.subr.mxu0 0.0
    %735 = vmatpush1.xpose.msra.mxu0 0.0
    %736 = vmatprep.subr.mxu0 0.0
    %737 = vmatpush1.xpose.msra.mxu0 0.0
    %738 = vmatprep.subr.mxu0 0.0
    %739 = vmatpush1.xpose.msra.mxu0 0.0
    %740 = vmatprep.subr.mxu0 0.0
    %741 = vmatpush1.xpose.msra.mxu0 0.0
    %742 = vmatprep.subr.mxu0 0.0
    %743 = vmatpush1.xpose.msra.mxu0 0.0
    %744 = vmatprep.subr.mxu0 0.0
    %745 = vmatpush1.xpose.msra.mxu0 0.0
    %746 = vmatprep.subr.mxu0 0.0
    %747 = vmatpush1.xpose.msra.mxu0 0.0
    %748 = vmatprep.subr.mxu0 0.0
    %749 = vmatpush1.xpose.msra.mxu0 %v716
    %750 = vmatprep.subr.mxu0 0.0
    %751 = vmatpush2.xpose.msra.mxu0 0.0
    %752 = vmatprep.subr.mxu0 0.0
    %753 = vmatpush2.xpose.msra.mxu0 0.0
    %754 = vmatprep.subr.mxu0 0.0
    %755 = vmatpush2.xpose.msra.mxu0 0.0
    %756 = vmatprep.subr.mxu0 0.0
    %757 = vmatpush2.xpose.msra.mxu0 0.0
    %758 = vmatprep.subr.mxu0 0.0
    %759 = vmatpush2.xpose.msra.mxu0 0.0
    %760 = vmatprep.subr.mxu0 0.0
    %761 = vmatpush2.xpose.msra.mxu0 0.0
    %762 = vmatprep.subr.mxu0 0.0
    %763 = vmatpush2.xpose.msra.mxu0 0.0
    %764 = vmatprep.subr.mxu0 0.0
    %765 = vmatpush2.xpose.msra.mxu0 0.0
    %766 = vmatprep.subr.mxu0 0.0
    %767 = vmatpush2.xpose.msra.mxu0 0.0
    %768 = vmatprep.subr.mxu0 0.0
    %769 = vmatpush2.xpose.msra.mxu0 0.0
    %770 = vmatprep.subr.mxu0 0.0
    %771 = vmatpush2.xpose.msra.mxu0 0.0
    %772 = vmatprep.subr.mxu0 0.0
    %773 = vmatpush2.xpose.msra.mxu0 0.0
    %774 = vmatprep.subr.mxu0 0.0
    %775 = vmatpush2.xpose.msra.mxu0 0.0
    %776 = vmatprep.subr.mxu0 0.0
    %777 = vmatpush2.xpose.msra.mxu0 0.0
    %778 = vmatprep.subr.mxu0 0.0
    %779 = vmatpush2.xpose.msra.mxu0 0.0
    %780 = vmatprep.subr.mxu0 0.0
    %781 = vmatpush2.xpose.msra.mxu0 0.0
    %782 = vmatprep.mubr.f32.mxu0 0.0
    %783 = vmatmul.mubr.f32.gmra.mxu0 %v714
    %v784 = vpop.f32.mrf.mxu0
    %v785 = vadd.f32 0.0, %v784
    %v786 = vpop.f32.mrf.mxu0
    %787 = vdwg.mxu0
    %789 = vrot.lane.b32.xlu0 %v271, 112
    %v790 = vpop.permute.xlu0 %789
    %v791 = vsel %vm636, %v271, 0
    %v793 = vsel %vm636, %v790, 0
    %795 = vmatprep.subr.mxu0 0.0
    %796 = vmatpush1.xpose.msra.mxu0 0.0
    %797 = vmatprep.subr.mxu0 0.0
    %798 = vmatpush1.xpose.msra.mxu0 0.0
    %799 = vmatprep.subr.mxu0 0.0
    %800 = vmatpush1.xpose.msra.mxu0 0.0
    %801 = vmatprep.subr.mxu0 0.0
    %802 = vmatpush1.xpose.msra.mxu0 0.0
    %803 = vmatprep.subr.mxu0 0.0
    %804 = vmatpush1.xpose.msra.mxu0 0.0
    %805 = vmatprep.subr.mxu0 0.0
    %806 = vmatpush1.xpose.msra.mxu0 0.0
    %807 = vmatprep.subr.mxu0 0.0
    %808 = vmatpush1.xpose.msra.mxu0 0.0
    %809 = vmatprep.subr.mxu0 0.0
    %810 = vmatpush1.xpose.msra.mxu0 0.0
    %811 = vmatprep.subr.mxu0 0.0
    %812 = vmatpush1.xpose.msra.mxu0 0.0
    %813 = vmatprep.subr.mxu0 0.0
    %814 = vmatpush1.xpose.msra.mxu0 0.0
    %815 = vmatprep.subr.mxu0 0.0
    %816 = vmatpush1.xpose.msra.mxu0 0.0
    %817 = vmatprep.subr.mxu0 0.0
    %818 = vmatpush1.xpose.msra.mxu0 0.0
    %819 = vmatprep.subr.mxu0 0.0
    %820 = vmatpush1.xpose.msra.mxu0 0.0
    %821 = vmatprep.subr.mxu0 0.0
    %822 = vmatpush1.xpose.msra.mxu0 0.0
    %823 = vmatprep.subr.mxu0 0.0
    %824 = vmatpush1.xpose.msra.mxu0 0.0
    %825 = vmatprep.subr.mxu0 0.0
    %826 = vmatpush1.xpose.msra.mxu0 %v793
    %827 = vmatprep.subr.mxu0 0.0
    %828 = vmatpush2.xpose.msra.mxu0 0.0
    %829 = vmatprep.subr.mxu0 0.0
    %830 = vmatpush2.xpose.msra.mxu0 0.0
    %831 = vmatprep.subr.mxu0 0.0
    %832 = vmatpush2.xpose.msra.mxu0 0.0
    %833 = vmatprep.subr.mxu0 0.0
    %834 = vmatpush2.xpose.msra.mxu0 0.0
    %835 = vmatprep.subr.mxu0 0.0
    %836 = vmatpush2.xpose.msra.mxu0 0.0
    %837 = vmatprep.subr.mxu0 0.0
    %838 = vmatpush2.xpose.msra.mxu0 0.0
    %839 = vmatprep.subr.mxu0 0.0
    %840 = vmatpush2.xpose.msra.mxu0 0.0
    %841 = vmatprep.subr.mxu0 0.0
    %842 = vmatpush2.xpose.msra.mxu0 0.0
    %843 = vmatprep.subr.mxu0 0.0
    %844 = vmatpush2.xpose.msra.mxu0 0.0
    %845 = vmatprep.subr.mxu0 0.0
    %846 = vmatpush2.xpose.msra.mxu0 0.0
    %847 = vmatprep.subr.mxu0 0.0
    %848 = vmatpush2.xpose.msra.mxu0 0.0
    %849 = vmatprep.subr.mxu0 0.0
    %850 = vmatpush2.xpose.msra.mxu0 0.0
    %851 = vmatprep.subr.mxu0 0.0
    %852 = vmatpush2.xpose.msra.mxu0 0.0
    %853 = vmatprep.subr.mxu0 0.0
    %854 = vmatpush2.xpose.msra.mxu0 0.0
    %855 = vmatprep.subr.mxu0 0.0
    %856 = vmatpush2.xpose.msra.mxu0 0.0
    %857 = vmatprep.subr.mxu0 0.0
    %858 = vmatpush2.xpose.msra.mxu0 0.0
    %859 = vmatprep.mubr.f32.mxu0 0.0
    %860 = vmatmul.mubr.f32.gmra.mxu0 %v791
    %v861 = vpop.f32.mrf.mxu0
    %v862 = vadd.f32 0.0, %v861
    %v863 = vpop.f32.mrf.mxu0
    %864 = vdwg.mxu0
    %866 = vrot.lane.b32.xlu0 %v341, 112
    %v867 = vpop.permute.xlu0 %866
    %v868 = vsel %vm636, %v341, 0
    %v870 = vsel %vm636, %v867, 0
    %872 = vmatprep.subr.mxu0 0.0
    %873 = vmatpush1.xpose.msra.mxu0 0.0
    %874 = vmatprep.subr.mxu0 0.0
    %875 = vmatpush1.xpose.msra.mxu0 0.0
    %876 = vmatprep.subr.mxu0 0.0
    %877 = vmatpush1.xpose.msra.mxu0 0.0
    %878 = vmatprep.subr.mxu0 0.0
    %879 = vmatpush1.xpose.msra.mxu0 0.0
    %880 = vmatprep.subr.mxu0 0.0
    %881 = vmatpush1.xpose.msra.mxu0 0.0
    %882 = vmatprep.subr.mxu0 0.0
    %883 = vmatpush1.xpose.msra.mxu0 0.0
    %884 = vmatprep.subr.mxu0 0.0
    %885 = vmatpush1.xpose.msra.mxu0 0.0
    %886 = vmatprep.subr.mxu0 0.0
    %887 = vmatpush1.xpose.msra.mxu0 0.0
    %888 = vmatprep.subr.mxu0 0.0
    %889 = vmatpush1.xpose.msra.mxu0 0.0
    %890 = vmatprep.subr.mxu0 0.0
    %891 = vmatpush1.xpose.msra.mxu0 0.0
    %892 = vmatprep.subr.mxu0 0.0
    %893 = vmatpush1.xpose.msra.mxu0 0.0
    %894 = vmatprep.subr.mxu0 0.0
    %895 = vmatpush1.xpose.msra.mxu0 0.0
    %896 = vmatprep.subr.mxu0 0.0
    %897 = vmatpush1.xpose.msra.mxu0 0.0
    %898 = vmatprep.subr.mxu0 0.0
    %899 = vmatpush1.xpose.msra.mxu0 0.0
    %900 = vmatprep.subr.mxu0 0.0
    %901 = vmatpush1.xpose.msra.mxu0 0.0
    %902 = vmatprep.subr.mxu0 0.0
    %903 = vmatpush1.xpose.msra.mxu0 %v870
    %904 = vmatprep.subr.mxu0 0.0
    %905 = vmatpush2.xpose.msra.mxu0 0.0
    %906 = vmatprep.subr.mxu0 0.0
    %907 = vmatpush2.xpose.msra.mxu0 0.0
    %908 = vmatprep.subr.mxu0 0.0
    %909 = vmatpush2.xpose.msra.mxu0 0.0
    %910 = vmatprep.subr.mxu0 0.0
    %911 = vmatpush2.xpose.msra.mxu0 0.0
    %912 = vmatprep.subr.mxu0 0.0
    %913 = vmatpush2.xpose.msra.mxu0 0.0
    %914 = vmatprep.subr.mxu0 0.0
    %915 = vmatpush2.xpose.msra.mxu0 0.0
    %916 = vmatprep.subr.mxu0 0.0
    %917 = vmatpush2.xpose.msra.mxu0 0.0
    %918 = vmatprep.subr.mxu0 0.0
    %919 = vmatpush2.xpose.msra.mxu0 0.0
    %920 = vmatprep.subr.mxu0 0.0
    %921 = vmatpush2.xpose.msra.mxu0 0.0
    %922 = vmatprep.subr.mxu0 0.0
    %923 = vmatpush2.xpose.msra.mxu0 0.0
    %924 = vmatprep.subr.mxu0 0.0
    %925 = vmatpush2.xpose.msra.mxu0 0.0
    %926 = vmatprep.subr.mxu0 0.0
    %927 = vmatpush2.xpose.msra.mxu0 0.0
    %928 = vmatprep.subr.mxu0 0.0
    %929 = vmatpush2.xpose.msra.mxu0 0.0
    %930 = vmatprep.subr.mxu0 0.0
    %931 = vmatpush2.xpose.msra.mxu0 0.0
    %932 = vmatprep.subr.mxu0 0.0
    %933 = vmatpush2.xpose.msra.mxu0 0.0
    %934 = vmatprep.subr.mxu0 0.0
    %935 = vmatpush2.xpose.msra.mxu0 0.0
    %936 = vmatprep.mubr.f32.mxu0 0.0
    %937 = vmatmul.mubr.f32.gmra.mxu0 %v868
    %v938 = vpop.f32.mrf.mxu0
    %v939 = vadd.f32 0.0, %v938
    %v940 = vpop.f32.mrf.mxu0
    %941 = vdwg.mxu0
    %943 = vrot.lane.b32.xlu0 %v414, 112
    %v944 = vpop.permute.xlu0 %943
    %v945 = vsel %vm636, %v414, 0
    %v947 = vsel %vm636, %v944, 0
    %949 = vmatprep.subr.mxu0 0.0
    %950 = vmatpush1.xpose.msra.mxu0 0.0
    %951 = vmatprep.subr.mxu0 0.0
    %952 = vmatpush1.xpose.msra.mxu0 0.0
    %953 = vmatprep.subr.mxu0 0.0
    %954 = vmatpush1.xpose.msra.mxu0 0.0
    %955 = vmatprep.subr.mxu0 0.0
    %956 = vmatpush1.xpose.msra.mxu0 0.0
    %957 = vmatprep.subr.mxu0 0.0
    %958 = vmatpush1.xpose.msra.mxu0 0.0
    %959 = vmatprep.subr.mxu0 0.0
    %960 = vmatpush1.xpose.msra.mxu0 0.0
    %961 = vmatprep.subr.mxu0 0.0
    %962 = vmatpush1.xpose.msra.mxu0 0.0
    %963 = vmatprep.subr.mxu0 0.0
    %964 = vmatpush1.xpose.msra.mxu0 0.0
    %965 = vmatprep.subr.mxu0 0.0
    %966 = vmatpush1.xpose.msra.mxu0 0.0
    %967 = vmatprep.subr.mxu0 0.0
    %968 = vmatpush1.xpose.msra.mxu0 0.0
    %969 = vmatprep.subr.mxu0 0.0
    %970 = vmatpush1.xpose.msra.mxu0 0.0
    %971 = vmatprep.subr.mxu0 0.0
    %972 = vmatpush1.xpose.msra.mxu0 0.0
    %973 = vmatprep.subr.mxu0 0.0
    %974 = vmatpush1.xpose.msra.mxu0 0.0
    %975 = vmatprep.subr.mxu0 0.0
    %976 = vmatpush1.xpose.msra.mxu0 0.0
    %977 = vmatprep.subr.mxu0 0.0
    %978 = vmatpush1.xpose.msra.mxu0 0.0
    %979 = vmatprep.subr.mxu0 0.0
    %980 = vmatpush1.xpose.msra.mxu0 %v947
    %981 = vmatprep.subr.mxu0 0.0
    %982 = vmatpush2.xpose.msra.mxu0 0.0
    %983 = vmatprep.subr.mxu0 0.0
    %984 = vmatpush2.xpose.msra.mxu0 0.0
    %985 = vmatprep.subr.mxu0 0.0
    %986 = vmatpush2.xpose.msra.mxu0 0.0
    %987 = vmatprep.subr.mxu0 0.0
    %988 = vmatpush2.xpose.msra.mxu0 0.0
    %989 = vmatprep.subr.mxu0 0.0
    %990 = vmatpush2.xpose.msra.mxu0 0.0
    %991 = vmatprep.subr.mxu0 0.0
    %992 = vmatpush2.xpose.msra.mxu0 0.0
    %993 = vmatprep.subr.mxu0 0.0
    %994 = vmatpush2.xpose.msra.mxu0 0.0
    %995 = vmatprep.subr.mxu0 0.0
    %996 = vmatpush2.xpose.msra.mxu0 0.0
    %997 = vmatprep.subr.mxu0 0.0
    %998 = vmatpush2.xpose.msra.mxu0 0.0
    %999 = vmatprep.subr.mxu0 0.0
    %1000 = vmatpush2.xpose.msra.mxu0 0.0
    %1001 = vmatprep.subr.mxu0 0.0
    %1002 = vmatpush2.xpose.msra.mxu0 0.0
    %1003 = vmatprep.subr.mxu0 0.0
    %1004 = vmatpush2.xpose.msra.mxu0 0.0
    %1005 = vmatprep.subr.mxu0 0.0
    %1006 = vmatpush2.xpose.msra.mxu0 0.0
    %1007 = vmatprep.subr.mxu0 0.0
    %1008 = vmatpush2.xpose.msra.mxu0 0.0
    %1009 = vmatprep.subr.mxu0 0.0
    %1010 = vmatpush2.xpose.msra.mxu0 0.0
    %1011 = vmatprep.subr.mxu0 0.0
    %1012 = vmatpush2.xpose.msra.mxu0 0.0
    %1013 = vmatprep.mubr.f32.mxu0 0.0
    %1014 = vmatmul.mubr.f32.gmra.mxu0 %v945
    %v1015 = vpop.f32.mrf.mxu0
    %v1016 = vadd.f32 0.0, %v1015
    %v1017 = vpop.f32.mrf.mxu0
    %1018 = vdwg.mxu0
    %1020 = vrot.lane.b32.xlu0 %v484, 112
    %v1021 = vpop.permute.xlu0 %1020
    %v1022 = vsel %vm636, %v484, 0
    %v1024 = vsel %vm636, %v1021, 0
    %1026 = vmatprep.subr.mxu0 0.0
    %1027 = vmatpush1.xpose.msra.mxu0 0.0
    %1028 = vmatprep.subr.mxu0 0.0
    %1029 = vmatpush1.xpose.msra.mxu0 0.0
    %1030 = vmatprep.subr.mxu0 0.0
    %1031 = vmatpush1.xpose.msra.mxu0 0.0
    %1032 = vmatprep.subr.mxu0 0.0
    %1033 = vmatpush1.xpose.msra.mxu0 0.0
    %1034 = vmatprep.subr.mxu0 0.0
    %1035 = vmatpush1.xpose.msra.mxu0 0.0
    %1036 = vmatprep.subr.mxu0 0.0
    %1037 = vmatpush1.xpose.msra.mxu0 0.0
    %1038 = vmatprep.subr.mxu0 0.0
    %1039 = vmatpush1.xpose.msra.mxu0 0.0
    %1040 = vmatprep.subr.mxu0 0.0
    %1041 = vmatpush1.xpose.msra.mxu0 0.0
    %1042 = vmatprep.subr.mxu0 0.0
    %1043 = vmatpush1.xpose.msra.mxu0 0.0
    %1044 = vmatprep.subr.mxu0 0.0
    %1045 = vmatpush1.xpose.msra.mxu0 0.0
    %1046 = vmatprep.subr.mxu0 0.0
    %1047 = vmatpush1.xpose.msra.mxu0 0.0
    %1048 = vmatprep.subr.mxu0 0.0
    %1049 = vmatpush1.xpose.msra.mxu0 0.0
    %1050 = vmatprep.subr.mxu0 0.0
    %1051 = vmatpush1.xpose.msra.mxu0 0.0
    %1052 = vmatprep.subr.mxu0 0.0
    %1053 = vmatpush1.xpose.msra.mxu0 0.0
    %1054 = vmatprep.subr.mxu0 0.0
    %1055 = vmatpush1.xpose.msra.mxu0 0.0
    %1056 = vmatprep.subr.mxu0 0.0
    %1057 = vmatpush1.xpose.msra.mxu0 %v1024
    %1058 = vmatprep.subr.mxu0 0.0
    %1059 = vmatpush2.xpose.msra.mxu0 0.0
    %1060 = vmatprep.subr.mxu0 0.0
    %1061 = vmatpush2.xpose.msra.mxu0 0.0
    %1062 = vmatprep.subr.mxu0 0.0
    %1063 = vmatpush2.xpose.msra.mxu0 0.0
    %1064 = vmatprep.subr.mxu0 0.0
    %1065 = vmatpush2.xpose.msra.mxu0 0.0
    %1066 = vmatprep.subr.mxu0 0.0
    %1067 = vmatpush2.xpose.msra.mxu0 0.0
    %1068 = vmatprep.subr.mxu0 0.0
    %1069 = vmatpush2.xpose.msra.mxu0 0.0
    %1070 = vmatprep.subr.mxu0 0.0
    %1071 = vmatpush2.xpose.msra.mxu0 0.0
    %1072 = vmatprep.subr.mxu0 0.0
    %1073 = vmatpush2.xpose.msra.mxu0 0.0
    %1074 = vmatprep.subr.mxu0 0.0
    %1075 = vmatpush2.xpose.msra.mxu0 0.0
    %1076 = vmatprep.subr.mxu0 0.0
    %1077 = vmatpush2.xpose.msra.mxu0 0.0
    %1078 = vmatprep.subr.mxu0 0.0
    %1079 = vmatpush2.xpose.msra.mxu0 0.0
    %1080 = vmatprep.subr.mxu0 0.0
    %1081 = vmatpush2.xpose.msra.mxu0 0.0
    %1082 = vmatprep.subr.mxu0 0.0
    %1083 = vmatpush2.xpose.msra.mxu0 0.0
    %1084 = vmatprep.subr.mxu0 0.0
    %1085 = vmatpush2.xpose.msra.mxu0 0.0
    %1086 = vmatprep.subr.mxu0 0.0
    %1087 = vmatpush2.xpose.msra.mxu0 0.0
    %1088 = vmatprep.subr.mxu0 0.0
    %1089 = vmatpush2.xpose.msra.mxu0 0.0
    %1090 = vmatprep.mubr.f32.mxu0 0.0
    %1091 = vmatmul.mubr.f32.gmra.mxu0 %v1022
    %v1092 = vpop.f32.mrf.mxu0
    %v1093 = vadd.f32 0.0, %v1092
    %v1094 = vpop.f32.mrf.mxu0
    %1095 = vdwg.mxu0
    %1097 = vrot.lane.b32.xlu0 %v554, 112
    %v1098 = vpop.permute.xlu0 %1097
    %v1099 = vsel %vm636, %v554, 0
    %v1101 = vsel %vm636, %v1098, 0
    %1103 = vmatprep.subr.mxu0 0.0
    %1104 = vmatpush1.xpose.msra.mxu0 0.0
    %1105 = vmatprep.subr.mxu0 0.0
    %1106 = vmatpush1.xpose.msra.mxu0 0.0
    %1107 = vmatprep.subr.mxu0 0.0
    %1108 = vmatpush1.xpose.msra.mxu0 0.0
    %1109 = vmatprep.subr.mxu0 0.0
    %1110 = vmatpush1.xpose.msra.mxu0 0.0
    %1111 = vmatprep.subr.mxu0 0.0
    %1112 = vmatpush1.xpose.msra.mxu0 0.0
    %1113 = vmatprep.subr.mxu0 0.0
    %1114 = vmatpush1.xpose.msra.mxu0 0.0
    %1115 = vmatprep.subr.mxu0 0.0
    %1116 = vmatpush1.xpose.msra.mxu0 0.0
    %1117 = vmatprep.subr.mxu0 0.0
    %1118 = vmatpush1.xpose.msra.mxu0 0.0
    %1119 = vmatprep.subr.mxu0 0.0
    %1120 = vmatpush1.xpose.msra.mxu0 0.0
    %1121 = vmatprep.subr.mxu0 0.0
    %1122 = vmatpush1.xpose.msra.mxu0 0.0
    %1123 = vmatprep.subr.mxu0 0.0
    %1124 = vmatpush1.xpose.msra.mxu0 0.0
    %1125 = vmatprep.subr.mxu0 0.0
    %1126 = vmatpush1.xpose.msra.mxu0 0.0
    %1127 = vmatprep.subr.mxu0 0.0
    %1128 = vmatpush1.xpose.msra.mxu0 0.0
    %1129 = vmatprep.subr.mxu0 0.0
    %1130 = vmatpush1.xpose.msra.mxu0 0.0
    %1131 = vmatprep.subr.mxu0 0.0
    %1132 = vmatpush1.xpose.msra.mxu0 0.0
    %1133 = vmatprep.subr.mxu0 0.0
    %1134 = vmatpush1.xpose.msra.mxu0 %v1101
    %1135 = vmatprep.subr.mxu0 0.0
    %1136 = vmatpush2.xpose.msra.mxu0 0.0
    %1137 = vmatprep.subr.mxu0 0.0
    %1138 = vmatpush2.xpose.msra.mxu0 0.0
    %1139 = vmatprep.subr.mxu0 0.0
    %1140 = vmatpush2.xpose.msra.mxu0 0.0
    %1141 = vmatprep.subr.mxu0 0.0
    %1142 = vmatpush2.xpose.msra.mxu0 0.0
    %1143 = vmatprep.subr.mxu0 0.0
    %1144 = vmatpush2.xpose.msra.mxu0 0.0
    %1145 = vmatprep.subr.mxu0 0.0
    %1146 = vmatpush2.xpose.msra.mxu0 0.0
    %1147 = vmatprep.subr.mxu0 0.0
    %1148 = vmatpush2.xpose.msra.mxu0 0.0
    %1149 = vmatprep.subr.mxu0 0.0
    %1150 = vmatpush2.xpose.msra.mxu0 0.0
    %1151 = vmatprep.subr.mxu0 0.0
    %1152 = vmatpush2.xpose.msra.mxu0 0.0
    %1153 = vmatprep.subr.mxu0 0.0
    %1154 = vmatpush2.xpose.msra.mxu0 0.0
    %1155 = vmatprep.subr.mxu0 0.0
    %1156 = vmatpush2.xpose.msra.mxu0 0.0
    %1157 = vmatprep.subr.mxu0 0.0
    %1158 = vmatpush2.xpose.msra.mxu0 0.0
    %1159 = vmatprep.subr.mxu0 0.0
    %1160 = vmatpush2.xpose.msra.mxu0 0.0
    %1161 = vmatprep.subr.mxu0 0.0
    %1162 = vmatpush2.xpose.msra.mxu0 0.0
    %1163 = vmatprep.subr.mxu0 0.0
    %1164 = vmatpush2.xpose.msra.mxu0 0.0
    %1165 = vmatprep.subr.mxu0 0.0
    %1166 = vmatpush2.xpose.msra.mxu0 0.0
    %1167 = vmatprep.mubr.f32.mxu0 0.0
    %1168 = vmatmul.mubr.f32.gmra.mxu0 %v1099
    %v1169 = vpop.f32.mrf.mxu0
    %v1170 = vadd.f32 0.0, %v1169
    %v1171 = vpop.f32.mrf.mxu0
    %1172 = vdwg.mxu0
    %1174 = vrot.lane.b32.xlu0 %v624, 112
    %v1175 = vpop.permute.xlu0 %1174
    %v1176 = vsel %vm636, %v624, 0
    %v1178 = vsel %vm636, %v1175, 0
    %1180 = vmatprep.subr.mxu0 0.0
    %1181 = vmatpush1.xpose.msra.mxu0 0.0
    %1182 = vmatprep.subr.mxu0 0.0
    %1183 = vmatpush1.xpose.msra.mxu0 0.0
    %1184 = vmatprep.subr.mxu0 0.0
    %1185 = vmatpush1.xpose.msra.mxu0 0.0
    %1186 = vmatprep.subr.mxu0 0.0
    %1187 = vmatpush1.xpose.msra.mxu0 0.0
    %1188 = vmatprep.subr.mxu0 0.0
    %1189 = vmatpush1.xpose.msra.mxu0 0.0
    %1190 = vmatprep.subr.mxu0 0.0
    %1191 = vmatpush1.xpose.msra.mxu0 0.0
    %1192 = vmatprep.subr.mxu0 0.0
    %1193 = vmatpush1.xpose.msra.mxu0 0.0
    %1194 = vmatprep.subr.mxu0 0.0
    %1195 = vmatpush1.xpose.msra.mxu0 0.0
    %1196 = vmatprep.subr.mxu0 0.0
    %1197 = vmatpush1.xpose.msra.mxu0 0.0
    %1198 = vmatprep.subr.mxu0 0.0
    %1199 = vmatpush1.xpose.msra.mxu0 0.0
    %1200 = vmatprep.subr.mxu0 0.0
    %1201 = vmatpush1.xpose.msra.mxu0 0.0
    %1202 = vmatprep.subr.mxu0 0.0
    %1203 = vmatpush1.xpose.msra.mxu0 0.0
    %1204 = vmatprep.subr.mxu0 0.0
    %1205 = vmatpush1.xpose.msra.mxu0 0.0
    %1206 = vmatprep.subr.mxu0 0.0
    %1207 = vmatpush1.xpose.msra.mxu0 0.0
    %1208 = vmatprep.subr.mxu0 0.0
    %1209 = vmatpush1.xpose.msra.mxu0 0.0
    %1210 = vmatprep.subr.mxu0 0.0
    %1211 = vmatpush1.xpose.msra.mxu0 %v1178
    %1212 = vmatprep.subr.mxu0 0.0
    %1213 = vmatpush2.xpose.msra.mxu0 0.0
    %1214 = vmatprep.subr.mxu0 0.0
    %1215 = vmatpush2.xpose.msra.mxu0 0.0
    %1216 = vmatprep.subr.mxu0 0.0
    %1217 = vmatpush2.xpose.msra.mxu0 0.0
    %1218 = vmatprep.subr.mxu0 0.0
    %1219 = vmatpush2.xpose.msra.mxu0 0.0
    %1220 = vmatprep.subr.mxu0 0.0
    %1221 = vmatpush2.xpose.msra.mxu0 0.0
    %1222 = vmatprep.subr.mxu0 0.0
    %1223 = vmatpush2.xpose.msra.mxu0 0.0
    %1224 = vmatprep.subr.mxu0 0.0
    %1225 = vmatpush2.xpose.msra.mxu0 0.0
    %1226 = vmatprep.subr.mxu0 0.0
    %1227 = vmatpush2.xpose.msra.mxu0 0.0
    %1228 = vmatprep.subr.mxu0 0.0
    %1229 = vmatpush2.xpose.msra.mxu0 0.0
    %1230 = vmatprep.subr.mxu0 0.0
    %1231 = vmatpush2.xpose.msra.mxu0 0.0
    %1232 = vmatprep.subr.mxu0 0.0
    %1233 = vmatpush2.xpose.msra.mxu0 0.0
    %1234 = vmatprep.subr.mxu0 0.0
    %1235 = vmatpush2.xpose.msra.mxu0 0.0
    %1236 = vmatprep.subr.mxu0 0.0
    %1237 = vmatpush2.xpose.msra.mxu0 0.0
    %1238 = vmatprep.subr.mxu0 0.0
    %1239 = vmatpush2.xpose.msra.mxu0 0.0
    %1240 = vmatprep.subr.mxu0 0.0
    %1241 = vmatpush2.xpose.msra.mxu0 0.0
    %1242 = vmatprep.subr.mxu0 0.0
    %1243 = vmatpush2.xpose.msra.mxu0 0.0
    %1244 = vmatprep.mubr.f32.mxu0 0.0
    %1245 = vmatmul.mubr.f32.gmra.mxu0 %v1176
    %v1246 = vpop.f32.mrf.mxu0
    %v1247 = vadd.f32 0.0, %v1246
    %v1248 = vpop.f32.mrf.mxu0
    %1249 = vdwg.mxu0
    %v1250 = vmul.f32 %v708, 0.125
    %v1251 = vmul.f32 %v785, 0.125
    %v1252 = vmul.f32 %v862, 0.125
    %v1253 = vmul.f32 %v939, 0.125
    %v1254 = vmul.f32 %v1016, 0.125
    %v1255 = vmul.f32 %v1093, 0.125
    %v1256 = vmul.f32 %v1170, 0.125
    %v1257 = vmul.f32 %v1247, 0.125
    %v1258 = vadd.f32 %v1250, %v632
    %v1259 = vadd.f32 %v1251, %v632
    %v1260 = vadd.f32 %v1252, %v632
    %v1261 = vadd.f32 %v1253, %v632
    %v1262 = vadd.f32 %v1254, %v632
    %v1263 = vadd.f32 %v1255, %v632
    %v1264 = vadd.f32 %v1256, %v632
    %v1265 = vadd.f32 %v1257, %v632
    %vm1266 = vcmask 64512
    %v1267 = vsel %vm1266, %v1258, -inf
    %1268 = vmax.xlane.f32.xlu0 %v1267
    %v1269 = vpop.xlane.xlu0 %1268
    %v1270 = vsel %vm1266, %v1259, -inf
    %1271 = vmax.xlane.f32.xlu0 %v1270
    %v1272 = vpop.xlane.xlu0 %1271
    %v1273 = vsel %vm1266, %v1260, -inf
    %1274 = vmax.xlane.f32.xlu0 %v1273
    %v1275 = vpop.xlane.xlu0 %1274
    %v1276 = vsel %vm1266, %v1261, -inf
    %1277 = vmax.xlane.f32.xlu0 %v1276
    %v1278 = vpop.xlane.xlu0 %1277
    %v1279 = vsel %vm1266, %v1262, -inf
    %1280 = vmax.xlane.f32.xlu0 %v1279
    %v1281 = vpop.xlane.xlu0 %1280
    %v1282 = vsel %vm1266, %v1263, -inf
    %1283 = vmax.xlane.f32.xlu0 %v1282
    %v1284 = vpop.xlane.xlu0 %1283
    %v1285 = vsel %vm1266, %v1264, -inf
    %1286 = vmax.xlane.f32.xlu0 %v1285
    %v1287 = vpop.xlane.xlu0 %1286
    %v1288 = vsel %vm1266, %v1265, -inf
    %1289 = vmax.xlane.f32.xlu0 %v1288
    %v1290 = vpop.xlane.xlu0 %1289
    %v1291 = vsub.f32 %v1258, %v1269
    %v1292 = vsub.f32 %v1259, %v1272
    %v1293 = vsub.f32 %v1260, %v1275
    %v1294 = vsub.f32 %v1261, %v1278
    %v1295 = vsub.f32 %v1262, %v1281
    %v1296 = vsub.f32 %v1263, %v1284
    %v1297 = vsub.f32 %v1264, %v1287
    %v1298 = vsub.f32 %v1265, %v1290
    %v1299 = vmul.f32 %v1291, 1.442695
    %v1300 = vpow.pop %v1299
    %v1301 = vmul.f32 %v1292, 1.442695
    %v1302 = vpow.pop %v1301
    %v1303 = vmul.f32 %v1293, 1.442695
    %v1304 = vpow.pop %v1303
    %v1305 = vmul.f32 %v1294, 1.442695
    %v1306 = vpow.pop %v1305
    %v1307 = vmul.f32 %v1295, 1.442695
    %v1308 = vpow.pop %v1307
    %v1309 = vmul.f32 %v1296, 1.442695
    %v1310 = vpow.pop %v1309
    %v1311 = vmul.f32 %v1297, 1.442695
    %v1312 = vpow.pop %v1311
    %v1313 = vmul.f32 %v1298, 1.442695
    %v1314 = vpow.pop %v1313
    %v1315 = vsel %vm1266, %v1300, 0.0
    %1316 = vadd.xlane.f32.xlu0 %v1315
    %v1317 = vpop.xlane.xlu0 %1316
    %v1318 = vsel %vm1266, %v1302, 0.0
    %1319 = vadd.xlane.f32.xlu0 %v1318
    %v1320 = vpop.xlane.xlu0 %1319
    %v1321 = vsel %vm1266, %v1304, 0.0
    %1322 = vadd.xlane.f32.xlu0 %v1321
    %v1323 = vpop.xlane.xlu0 %1322
    %v1324 = vsel %vm1266, %v1306, 0.0
    %1325 = vadd.xlane.f32.xlu0 %v1324
    %v1326 = vpop.xlane.xlu0 %1325
    %v1327 = vsel %vm1266, %v1308, 0.0
    %1328 = vadd.xlane.f32.xlu0 %v1327
    %v1329 = vpop.xlane.xlu0 %1328
    %v1330 = vsel %vm1266, %v1310, 0.0
    %1331 = vadd.xlane.f32.xlu0 %v1330
    %v1332 = vpop.xlane.xlu0 %1331
    %v1333 = vsel %vm1266, %v1312, 0.0
    %1334 = vadd.xlane.f32.xlu0 %v1333
    %v1335 = vpop.xlane.xlu0 %1334
    %v1336 = vsel %vm1266, %v1314, 0.0
    %1337 = vadd.xlane.f32.xlu0 %v1336
    %v1338 = vpop.xlane.xlu0 %1337
    %v1339 = vrcp.pop %v1317
    %v1340 = vrcp.pop %v1320
    %v1341 = vrcp.pop %v1323
    %v1342 = vrcp.pop %v1326
    %v1343 = vrcp.pop %v1329
    %v1344 = vrcp.pop %v1332
    %v1345 = vrcp.pop %v1335
    %v1346 = vrcp.pop %v1338
    %v1347 = vmul.f32 %v1300, %v1339
    %v1348 = vmul.f32 %v1302, %v1340
    %v1349 = vmul.f32 %v1304, %v1341
    %v1350 = vmul.f32 %v1306, %v1342
    %v1351 = vmul.f32 %v1308, %v1343
    %v1352 = vmul.f32 %v1310, %v1344
    %v1353 = vmul.f32 %v1312, %v1345
    %v1354 = vmul.f32 %v1314, %v1346
    %1355 = vrot.lane.b32.xlu0 %v131, 96
    %v1356 = vpop.permute.xlu0 %1355
    %v1359 = vsel %vm1266, %v1347, 0
    %1361 = vmatprep.subr.mxu0 0.0
    %1362 = vmatpush1.msra.mxu0 0.0
    %1363 = vmatprep.subr.mxu0 0.0
    %1364 = vmatpush1.msra.mxu0 0.0
    %1365 = vmatprep.subr.mxu0 0.0
    %1366 = vmatpush1.msra.mxu0 0.0
    %1367 = vmatprep.subr.mxu0 0.0
    %1368 = vmatpush1.msra.mxu0 0.0
    %1369 = vmatprep.subr.mxu0 0.0
    %1370 = vmatpush1.msra.mxu0 0.0
    %1371 = vmatprep.subr.mxu0 0.0
    %1372 = vmatpush1.msra.mxu0 0.0
    %1373 = vmatprep.subr.mxu0 0.0
    %1374 = vmatpush1.msra.mxu0 0.0
    %1375 = vmatprep.subr.mxu0 0.0
    %1376 = vmatpush1.msra.mxu0 0.0
    %1377 = vmatprep.subr.mxu0 0.0
    %1378 = vmatpush1.msra.mxu0 0.0
    %1379 = vmatprep.subr.mxu0 0.0
    %1380 = vmatpush1.msra.mxu0 0.0
    %1381 = vmatprep.subr.mxu0 0.0
    %1382 = vmatpush1.msra.mxu0 0.0
    %1383 = vmatprep.subr.mxu0 0.0
    %1384 = vmatpush1.msra.mxu0 0.0
    %1385 = vmatprep.subr.mxu0 0.0
    %1386 = vmatpush1.msra.mxu0 0.0
    %1387 = vmatprep.subr.mxu0 0.0
    %1388 = vmatpush1.msra.mxu0 0.0
    %1389 = vmatprep.subr.mxu0 0.0
    %1390 = vmatpush1.msra.mxu0 0.0
    %1391 = vmatprep.subr.mxu0 0.0
    %1392 = vmatpush1.msra.mxu0 %v1356
    %1393 = vmatprep.subr.mxu0 0.0
    %1394 = vmatpush2.msra.mxu0 0.0
    %1395 = vmatprep.subr.mxu0 0.0
    %1396 = vmatpush2.msra.mxu0 0.0
    %1397 = vmatprep.subr.mxu0 0.0
    %1398 = vmatpush2.msra.mxu0 0.0
    %1399 = vmatprep.subr.mxu0 0.0
    %1400 = vmatpush2.msra.mxu0 0.0
    %1401 = vmatprep.subr.mxu0 0.0
    %1402 = vmatpush2.msra.mxu0 0.0
    %1403 = vmatprep.subr.mxu0 0.0
    %1404 = vmatpush2.msra.mxu0 0.0
    %1405 = vmatprep.subr.mxu0 0.0
    %1406 = vmatpush2.msra.mxu0 0.0
    %1407 = vmatprep.subr.mxu0 0.0
    %1408 = vmatpush2.msra.mxu0 0.0
    %1409 = vmatprep.subr.mxu0 0.0
    %1410 = vmatpush2.msra.mxu0 0.0
    %1411 = vmatprep.subr.mxu0 0.0
    %1412 = vmatpush2.msra.mxu0 0.0
    %1413 = vmatprep.subr.mxu0 0.0
    %1414 = vmatpush2.msra.mxu0 0.0
    %1415 = vmatprep.subr.mxu0 0.0
    %1416 = vmatpush2.msra.mxu0 0.0
    %1417 = vmatprep.subr.mxu0 0.0
    %1418 = vmatpush2.msra.mxu0 0.0
    %1419 = vmatprep.subr.mxu0 0.0
    %1420 = vmatpush2.msra.mxu0 0.0
    %1421 = vmatprep.subr.mxu0 0.0
    %1422 = vmatpush2.msra.mxu0 0.0
    %1423 = vmatprep.subr.mxu0 0.0
    %1424 = vmatpush2.msra.mxu0 0.0
    %1425 = vmatprep.mubr.f32.mxu0 0.0
    %1426 = vmatmul.mubr.f32.gmra.mxu0 %v1359
    %v1427 = vpop.f32.mrf.mxu0
    %v1428 = vadd.f32 0.0, %v1427
    %v1429 = vpop.f32.mrf.mxu0
    %1430 = vdwg.mxu0
    %1431 = vrot.lane.b32.xlu0 %v201, 96
    %v1432 = vpop.permute.xlu0 %1431
    %v1435 = vsel %vm1266, %v1348, 0
    %1437 = vmatprep.subr.mxu0 0.0
    %1438 = vmatpush1.msra.mxu0 0.0
    %1439 = vmatprep.subr.mxu0 0.0
    %1440 = vmatpush1.msra.mxu0 0.0
    %1441 = vmatprep.subr.mxu0 0.0
    %1442 = vmatpush1.msra.mxu0 0.0
    %1443 = vmatprep.subr.mxu0 0.0
    %1444 = vmatpush1.msra.mxu0 0.0
    %1445 = vmatprep.subr.mxu0 0.0
    %1446 = vmatpush1.msra.mxu0 0.0
    %1447 = vmatprep.subr.mxu0 0.0
    %1448 = vmatpush1.msra.mxu0 0.0
    %1449 = vmatprep.subr.mxu0 0.0
    %1450 = vmatpush1.msra.mxu0 0.0
    %1451 = vmatprep.subr.mxu0 0.0
    %1452 = vmatpush1.msra.mxu0 0.0
    %1453 = vmatprep.subr.mxu0 0.0
    %1454 = vmatpush1.msra.mxu0 0.0
    %1455 = vmatprep.subr.mxu0 0.0
    %1456 = vmatpush1.msra.mxu0 0.0
    %1457 = vmatprep.subr.mxu0 0.0
    %1458 = vmatpush1.msra.mxu0 0.0
    %1459 = vmatprep.subr.mxu0 0.0
    %1460 = vmatpush1.msra.mxu0 0.0
    %1461 = vmatprep.subr.mxu0 0.0
    %1462 = vmatpush1.msra.mxu0 0.0
    %1463 = vmatprep.subr.mxu0 0.0
    %1464 = vmatpush1.msra.mxu0 0.0
    %1465 = vmatprep.subr.mxu0 0.0
    %1466 = vmatpush1.msra.mxu0 0.0
    %1467 = vmatprep.subr.mxu0 0.0
    %1468 = vmatpush1.msra.mxu0 %v1432
    %1469 = vmatprep.subr.mxu0 0.0
    %1470 = vmatpush2.msra.mxu0 0.0
    %1471 = vmatprep.subr.mxu0 0.0
    %1472 = vmatpush2.msra.mxu0 0.0
    %1473 = vmatprep.subr.mxu0 0.0
    %1474 = vmatpush2.msra.mxu0 0.0
    %1475 = vmatprep.subr.mxu0 0.0
    %1476 = vmatpush2.msra.mxu0 0.0
    %1477 = vmatprep.subr.mxu0 0.0
    %1478 = vmatpush2.msra.mxu0 0.0
    %1479 = vmatprep.subr.mxu0 0.0
    %1480 = vmatpush2.msra.mxu0 0.0
    %1481 = vmatprep.subr.mxu0 0.0
    %1482 = vmatpush2.msra.mxu0 0.0
    %1483 = vmatprep.subr.mxu0 0.0
    %1484 = vmatpush2.msra.mxu0 0.0
    %1485 = vmatprep.subr.mxu0 0.0
    %1486 = vmatpush2.msra.mxu0 0.0
    %1487 = vmatprep.subr.mxu0 0.0
    %1488 = vmatpush2.msra.mxu0 0.0
    %1489 = vmatprep.subr.mxu0 0.0
    %1490 = vmatpush2.msra.mxu0 0.0
    %1491 = vmatprep.subr.mxu0 0.0
    %1492 = vmatpush2.msra.mxu0 0.0
    %1493 = vmatprep.subr.mxu0 0.0
    %1494 = vmatpush2.msra.mxu0 0.0
    %1495 = vmatprep.subr.mxu0 0.0
    %1496 = vmatpush2.msra.mxu0 0.0
    %1497 = vmatprep.subr.mxu0 0.0
    %1498 = vmatpush2.msra.mxu0 0.0
    %1499 = vmatprep.subr.mxu0 0.0
    %1500 = vmatpush2.msra.mxu0 0.0
    %1501 = vmatprep.mubr.f32.mxu0 0.0
    %1502 = vmatmul.mubr.f32.gmra.mxu0 %v1435
    %v1503 = vpop.f32.mrf.mxu0
    %v1504 = vadd.f32 0.0, %v1503
    %v1505 = vpop.f32.mrf.mxu0
    %1506 = vdwg.mxu0
    %1507 = vrot.lane.b32.xlu0 %v271, 96
    %v1508 = vpop.permute.xlu0 %1507
    %v1511 = vsel %vm1266, %v1349, 0
    %1513 = vmatprep.subr.mxu0 0.0
    %1514 = vmatpush1.msra.mxu0 0.0
    %1515 = vmatprep.subr.mxu0 0.0
    %1516 = vmatpush1.msra.mxu0 0.0
    %1517 = vmatprep.subr.mxu0 0.0
    %1518 = vmatpush1.msra.mxu0 0.0
    %1519 = vmatprep.subr.mxu0 0.0
    %1520 = vmatpush1.msra.mxu0 0.0
    %1521 = vmatprep.subr.mxu0 0.0
    %1522 = vmatpush1.msra.mxu0 0.0
    %1523 = vmatprep.subr.mxu0 0.0
    %1524 = vmatpush1.msra.mxu0 0.0
    %1525 = vmatprep.subr.mxu0 0.0
    %1526 = vmatpush1.msra.mxu0 0.0
    %1527 = vmatprep.subr.mxu0 0.0
    %1528 = vmatpush1.msra.mxu0 0.0
    %1529 = vmatprep.subr.mxu0 0.0
    %1530 = vmatpush1.msra.mxu0 0.0
    %1531 = vmatprep.subr.mxu0 0.0
    %1532 = vmatpush1.msra.mxu0 0.0
    %1533 = vmatprep.subr.mxu0 0.0
    %1534 = vmatpush1.msra.mxu0 0.0
    %1535 = vmatprep.subr.mxu0 0.0
    %1536 = vmatpush1.msra.mxu0 0.0
    %1537 = vmatprep.subr.mxu0 0.0
    %1538 = vmatpush1.msra.mxu0 0.0
    %1539 = vmatprep.subr.mxu0 0.0
    %1540 = vmatpush1.msra.mxu0 0.0
    %1541 = vmatprep.subr.mxu0 0.0
    %1542 = vmatpush1.msra.mxu0 0.0
    %1543 = vmatprep.subr.mxu0 0.0
    %1544 = vmatpush1.msra.mxu0 %v1508
    %1545 = vmatprep.subr.mxu0 0.0
    %1546 = vmatpush2.msra.mxu0 0.0
    %1547 = vmatprep.subr.mxu0 0.0
    %1548 = vmatpush2.msra.mxu0 0.0
    %1549 = vmatprep.subr.mxu0 0.0
    %1550 = vmatpush2.msra.mxu0 0.0
    %1551 = vmatprep.subr.mxu0 0.0
    %1552 = vmatpush2.msra.mxu0 0.0
    %1553 = vmatprep.subr.mxu0 0.0
    %1554 = vmatpush2.msra.mxu0 0.0
    %1555 = vmatprep.subr.mxu0 0.0
    %1556 = vmatpush2.msra.mxu0 0.0
    %1557 = vmatprep.subr.mxu0 0.0
    %1558 = vmatpush2.msra.mxu0 0.0
    %1559 = vmatprep.subr.mxu0 0.0
    %1560 = vmatpush2.msra.mxu0 0.0
    %1561 = vmatprep.subr.mxu0 0.0
    %1562 = vmatpush2.msra.mxu0 0.0
    %1563 = vmatprep.subr.mxu0 0.0
    %1564 = vmatpush2.msra.mxu0 0.0
    %1565 = vmatprep.subr.mxu0 0.0
    %1566 = vmatpush2.msra.mxu0 0.0
    %1567 = vmatprep.subr.mxu0 0.0
    %1568 = vmatpush2.msra.mxu0 0.0
    %1569 = vmatprep.subr.mxu0 0.0
    %1570 = vmatpush2.msra.mxu0 0.0
    %1571 = vmatprep.subr.mxu0 0.0
    %1572 = vmatpush2.msra.mxu0 0.0
    %1573 = vmatprep.subr.mxu0 0.0
    %1574 = vmatpush2.msra.mxu0 0.0
    %1575 = vmatprep.subr.mxu0 0.0
    %1576 = vmatpush2.msra.mxu0 0.0
    %1577 = vmatprep.mubr.f32.mxu0 0.0
    %1578 = vmatmul.mubr.f32.gmra.mxu0 %v1511
    %v1579 = vpop.f32.mrf.mxu0
    %v1580 = vadd.f32 0.0, %v1579
    %v1581 = vpop.f32.mrf.mxu0
    %1582 = vdwg.mxu0
    %1583 = vrot.lane.b32.xlu0 %v341, 96
    %v1584 = vpop.permute.xlu0 %1583
    %v1587 = vsel %vm1266, %v1350, 0
    %1589 = vmatprep.subr.mxu0 0.0
    %1590 = vmatpush1.msra.mxu0 0.0
    %1591 = vmatprep.subr.mxu0 0.0
    %1592 = vmatpush1.msra.mxu0 0.0
    %1593 = vmatprep.subr.mxu0 0.0
    %1594 = vmatpush1.msra.mxu0 0.0
    %1595 = vmatprep.subr.mxu0 0.0
    %1596 = vmatpush1.msra.mxu0 0.0
    %1597 = vmatprep.subr.mxu0 0.0
    %1598 = vmatpush1.msra.mxu0 0.0
    %1599 = vmatprep.subr.mxu0 0.0
    %1600 = vmatpush1.msra.mxu0 0.0
    %1601 = vmatprep.subr.mxu0 0.0
    %1602 = vmatpush1.msra.mxu0 0.0
    %1603 = vmatprep.subr.mxu0 0.0
    %1604 = vmatpush1.msra.mxu0 0.0
    %1605 = vmatprep.subr.mxu0 0.0
    %1606 = vmatpush1.msra.mxu0 0.0
    %1607 = vmatprep.subr.mxu0 0.0
    %1608 = vmatpush1.msra.mxu0 0.0
    %1609 = vmatprep.subr.mxu0 0.0
    %1610 = vmatpush1.msra.mxu0 0.0
    %1611 = vmatprep.subr.mxu0 0.0
    %1612 = vmatpush1.msra.mxu0 0.0
    %1613 = vmatprep.subr.mxu0 0.0
    %1614 = vmatpush1.msra.mxu0 0.0
    %1615 = vmatprep.subr.mxu0 0.0
    %1616 = vmatpush1.msra.mxu0 0.0
    %1617 = vmatprep.subr.mxu0 0.0
    %1618 = vmatpush1.msra.mxu0 0.0
    %1619 = vmatprep.subr.mxu0 0.0
    %1620 = vmatpush1.msra.mxu0 %v1584
    %1621 = vmatprep.subr.mxu0 0.0
    %1622 = vmatpush2.msra.mxu0 0.0
    %1623 = vmatprep.subr.mxu0 0.0
    %1624 = vmatpush2.msra.mxu0 0.0
    %1625 = vmatprep.subr.mxu0 0.0
    %1626 = vmatpush2.msra.mxu0 0.0
    %1627 = vmatprep.subr.mxu0 0.0
    %1628 = vmatpush2.msra.mxu0 0.0
    %1629 = vmatprep.subr.mxu0 0.0
    %1630 = vmatpush2.msra.mxu0 0.0
    %1631 = vmatprep.subr.mxu0 0.0
    %1632 = vmatpush2.msra.mxu0 0.0
    %1633 = vmatprep.subr.mxu0 0.0
    %1634 = vmatpush2.msra.mxu0 0.0
    %1635 = vmatprep.subr.mxu0 0.0
    %1636 = vmatpush2.msra.mxu0 0.0
    %1637 = vmatprep.subr.mxu0 0.0
    %1638 = vmatpush2.msra.mxu0 0.0
    %1639 = vmatprep.subr.mxu0 0.0
    %1640 = vmatpush2.msra.mxu0 0.0
    %1641 = vmatprep.subr.mxu0 0.0
    %1642 = vmatpush2.msra.mxu0 0.0
    %1643 = vmatprep.subr.mxu0 0.0
    %1644 = vmatpush2.msra.mxu0 0.0
    %1645 = vmatprep.subr.mxu0 0.0
    %1646 = vmatpush2.msra.mxu0 0.0
    %1647 = vmatprep.subr.mxu0 0.0
    %1648 = vmatpush2.msra.mxu0 0.0
    %1649 = vmatprep.subr.mxu0 0.0
    %1650 = vmatpush2.msra.mxu0 0.0
    %1651 = vmatprep.subr.mxu0 0.0
    %1652 = vmatpush2.msra.mxu0 0.0
    %1653 = vmatprep.mubr.f32.mxu0 0.0
    %1654 = vmatmul.mubr.f32.gmra.mxu0 %v1587
    %v1655 = vpop.f32.mrf.mxu0
    %v1656 = vadd.f32 0.0, %v1655
    %v1657 = vpop.f32.mrf.mxu0
    %1658 = vdwg.mxu0
    %1659 = vrot.lane.b32.xlu0 %v414, 96
    %v1660 = vpop.permute.xlu0 %1659
    %v1663 = vsel %vm1266, %v1351, 0
    %1665 = vmatprep.subr.mxu0 0.0
    %1666 = vmatpush1.msra.mxu0 0.0
    %1667 = vmatprep.subr.mxu0 0.0
    %1668 = vmatpush1.msra.mxu0 0.0
    %1669 = vmatprep.subr.mxu0 0.0
    %1670 = vmatpush1.msra.mxu0 0.0
    %1671 = vmatprep.subr.mxu0 0.0
    %1672 = vmatpush1.msra.mxu0 0.0
    %1673 = vmatprep.subr.mxu0 0.0
    %1674 = vmatpush1.msra.mxu0 0.0
    %1675 = vmatprep.subr.mxu0 0.0
    %1676 = vmatpush1.msra.mxu0 0.0
    %1677 = vmatprep.subr.mxu0 0.0
    %1678 = vmatpush1.msra.mxu0 0.0
    %1679 = vmatprep.subr.mxu0 0.0
    %1680 = vmatpush1.msra.mxu0 0.0
    %1681 = vmatprep.subr.mxu0 0.0
    %1682 = vmatpush1.msra.mxu0 0.0
    %1683 = vmatprep.subr.mxu0 0.0
    %1684 = vmatpush1.msra.mxu0 0.0
    %1685 = vmatprep.subr.mxu0 0.0
    %1686 = vmatpush1.msra.mxu0 0.0
    %1687 = vmatprep.subr.mxu0 0.0
    %1688 = vmatpush1.msra.mxu0 0.0
    %1689 = vmatprep.subr.mxu0 0.0
    %1690 = vmatpush1.msra.mxu0 0.0
    %1691 = vmatprep.subr.mxu0 0.0
    %1692 = vmatpush1.msra.mxu0 0.0
    %1693 = vmatprep.subr.mxu0 0.0
    %1694 = vmatpush1.msra.mxu0 0.0
    %1695 = vmatprep.subr.mxu0 0.0
    %1696 = vmatpush1.msra.mxu0 %v1660
    %1697 = vmatprep.subr.mxu0 0.0
    %1698 = vmatpush2.msra.mxu0 0.0
    %1699 = vmatprep.subr.mxu0 0.0
    %1700 = vmatpush2.msra.mxu0 0.0
    %1701 = vmatprep.subr.mxu0 0.0
    %1702 = vmatpush2.msra.mxu0 0.0
    %1703 = vmatprep.subr.mxu0 0.0
    %1704 = vmatpush2.msra.mxu0 0.0
    %1705 = vmatprep.subr.mxu0 0.0
    %1706 = vmatpush2.msra.mxu0 0.0
    %1707 = vmatprep.subr.mxu0 0.0
    %1708 = vmatpush2.msra.mxu0 0.0
    %1709 = vmatprep.subr.mxu0 0.0
    %1710 = vmatpush2.msra.mxu0 0.0
    %1711 = vmatprep.subr.mxu0 0.0
    %1712 = vmatpush2.msra.mxu0 0.0
    %1713 = vmatprep.subr.mxu0 0.0
    %1714 = vmatpush2.msra.mxu0 0.0
    %1715 = vmatprep.subr.mxu0 0.0
    %1716 = vmatpush2.msra.mxu0 0.0
    %1717 = vmatprep.subr.mxu0 0.0
    %1718 = vmatpush2.msra.mxu0 0.0
    %1719 = vmatprep.subr.mxu0 0.0
    %1720 = vmatpush2.msra.mxu0 0.0
    %1721 = vmatprep.subr.mxu0 0.0
    %1722 = vmatpush2.msra.mxu0 0.0
    %1723 = vmatprep.subr.mxu0 0.0
    %1724 = vmatpush2.msra.mxu0 0.0
    %1725 = vmatprep.subr.mxu0 0.0
    %1726 = vmatpush2.msra.mxu0 0.0
    %1727 = vmatprep.subr.mxu0 0.0
    %1728 = vmatpush2.msra.mxu0 0.0
    %1729 = vmatprep.mubr.f32.mxu0 0.0
    %1730 = vmatmul.mubr.f32.gmra.mxu0 %v1663
    %v1731 = vpop.f32.mrf.mxu0
    %v1732 = vadd.f32 0.0, %v1731
    %v1733 = vpop.f32.mrf.mxu0
    %1734 = vdwg.mxu0
    %1735 = vrot.lane.b32.xlu0 %v484, 96
    %v1736 = vpop.permute.xlu0 %1735
    %v1739 = vsel %vm1266, %v1352, 0
    %1741 = vmatprep.subr.mxu0 0.0
    %1742 = vmatpush1.msra.mxu0 0.0
    %1743 = vmatprep.subr.mxu0 0.0
    %1744 = vmatpush1.msra.mxu0 0.0
    %1745 = vmatprep.subr.mxu0 0.0
    %1746 = vmatpush1.msra.mxu0 0.0
    %1747 = vmatprep.subr.mxu0 0.0
    %1748 = vmatpush1.msra.mxu0 0.0
    %1749 = vmatprep.subr.mxu0 0.0
    %1750 = vmatpush1.msra.mxu0 0.0
    %1751 = vmatprep.subr.mxu0 0.0
    %1752 = vmatpush1.msra.mxu0 0.0
    %1753 = vmatprep.subr.mxu0 0.0
    %1754 = vmatpush1.msra.mxu0 0.0
    %1755 = vmatprep.subr.mxu0 0.0
    %1756 = vmatpush1.msra.mxu0 0.0
    %1757 = vmatprep.subr.mxu0 0.0
    %1758 = vmatpush1.msra.mxu0 0.0
    %1759 = vmatprep.subr.mxu0 0.0
    %1760 = vmatpush1.msra.mxu0 0.0
    %1761 = vmatprep.subr.mxu0 0.0
    %1762 = vmatpush1.msra.mxu0 0.0
    %1763 = vmatprep.subr.mxu0 0.0
    %1764 = vmatpush1.msra.mxu0 0.0
    %1765 = vmatprep.subr.mxu0 0.0
    %1766 = vmatpush1.msra.mxu0 0.0
    %1767 = vmatprep.subr.mxu0 0.0
    %1768 = vmatpush1.msra.mxu0 0.0
    %1769 = vmatprep.subr.mxu0 0.0
    %1770 = vmatpush1.msra.mxu0 0.0
    %1771 = vmatprep.subr.mxu0 0.0
    %1772 = vmatpush1.msra.mxu0 %v1736
    %1773 = vmatprep.subr.mxu0 0.0
    %1774 = vmatpush2.msra.mxu0 0.0
    %1775 = vmatprep.subr.mxu0 0.0
    %1776 = vmatpush2.msra.mxu0 0.0
    %1777 = vmatprep.subr.mxu0 0.0
    %1778 = vmatpush2.msra.mxu0 0.0
    %1779 = vmatprep.subr.mxu0 0.0
    %1780 = vmatpush2.msra.mxu0 0.0
    %1781 = vmatprep.subr.mxu0 0.0
    %1782 = vmatpush2.msra.mxu0 0.0
    %1783 = vmatprep.subr.mxu0 0.0
    %1784 = vmatpush2.msra.mxu0 0.0
    %1785 = vmatprep.subr.mxu0 0.0
    %1786 = vmatpush2.msra.mxu0 0.0
    %1787 = vmatprep.subr.mxu0 0.0
    %1788 = vmatpush2.msra.mxu0 0.0
    %1789 = vmatprep.subr.mxu0 0.0
    %1790 = vmatpush2.msra.mxu0 0.0
    %1791 = vmatprep.subr.mxu0 0.0
    %1792 = vmatpush2.msra.mxu0 0.0
    %1793 = vmatprep.subr.mxu0 0.0
    %1794 = vmatpush2.msra.mxu0 0.0
    %1795 = vmatprep.subr.mxu0 0.0
    %1796 = vmatpush2.msra.mxu0 0.0
    %1797 = vmatprep.subr.mxu0 0.0
    %1798 = vmatpush2.msra.mxu0 0.0
    %1799 = vmatprep.subr.mxu0 0.0
    %1800 = vmatpush2.msra.mxu0 0.0
    %1801 = vmatprep.subr.mxu0 0.0
    %1802 = vmatpush2.msra.mxu0 0.0
    %1803 = vmatprep.subr.mxu0 0.0
    %1804 = vmatpush2.msra.mxu0 0.0
    %1805 = vmatprep.mubr.f32.mxu0 0.0
    %1806 = vmatmul.mubr.f32.gmra.mxu0 %v1739
    %v1807 = vpop.f32.mrf.mxu0
    %v1808 = vadd.f32 0.0, %v1807
    %v1809 = vpop.f32.mrf.mxu0
    %1810 = vdwg.mxu0
    %1811 = vrot.lane.b32.xlu0 %v554, 96
    %v1812 = vpop.permute.xlu0 %1811
    %v1815 = vsel %vm1266, %v1353, 0
    %1817 = vmatprep.subr.mxu0 0.0
    %1818 = vmatpush1.msra.mxu0 0.0
    %1819 = vmatprep.subr.mxu0 0.0
    %1820 = vmatpush1.msra.mxu0 0.0
    %1821 = vmatprep.subr.mxu0 0.0
    %1822 = vmatpush1.msra.mxu0 0.0
    %1823 = vmatprep.subr.mxu0 0.0
    %1824 = vmatpush1.msra.mxu0 0.0
    %1825 = vmatprep.subr.mxu0 0.0
    %1826 = vmatpush1.msra.mxu0 0.0
    %1827 = vmatprep.subr.mxu0 0.0
    %1828 = vmatpush1.msra.mxu0 0.0
    %1829 = vmatprep.subr.mxu0 0.0
    %1830 = vmatpush1.msra.mxu0 0.0
    %1831 = vmatprep.subr.mxu0 0.0
    %1832 = vmatpush1.msra.mxu0 0.0
    %1833 = vmatprep.subr.mxu0 0.0
    %1834 = vmatpush1.msra.mxu0 0.0
    %1835 = vmatprep.subr.mxu0 0.0
    %1836 = vmatpush1.msra.mxu0 0.0
    %1837 = vmatprep.subr.mxu0 0.0
    %1838 = vmatpush1.msra.mxu0 0.0
    %1839 = vmatprep.subr.mxu0 0.0
    %1840 = vmatpush1.msra.mxu0 0.0
    %1841 = vmatprep.subr.mxu0 0.0
    %1842 = vmatpush1.msra.mxu0 0.0
    %1843 = vmatprep.subr.mxu0 0.0
    %1844 = vmatpush1.msra.mxu0 0.0
    %1845 = vmatprep.subr.mxu0 0.0
    %1846 = vmatpush1.msra.mxu0 0.0
    %1847 = vmatprep.subr.mxu0 0.0
    %1848 = vmatpush1.msra.mxu0 %v1812
    %1849 = vmatprep.subr.mxu0 0.0
    %1850 = vmatpush2.msra.mxu0 0.0
    %1851 = vmatprep.subr.mxu0 0.0
    %1852 = vmatpush2.msra.mxu0 0.0
    %1853 = vmatprep.subr.mxu0 0.0
    %1854 = vmatpush2.msra.mxu0 0.0
    %1855 = vmatprep.subr.mxu0 0.0
    %1856 = vmatpush2.msra.mxu0 0.0
    %1857 = vmatprep.subr.mxu0 0.0
    %1858 = vmatpush2.msra.mxu0 0.0
    %1859 = vmatprep.subr.mxu0 0.0
    %1860 = vmatpush2.msra.mxu0 0.0
    %1861 = vmatprep.subr.mxu0 0.0
    %1862 = vmatpush2.msra.mxu0 0.0
    %1863 = vmatprep.subr.mxu0 0.0
    %1864 = vmatpush2.msra.mxu0 0.0
    %1865 = vmatprep.subr.mxu0 0.0
    %1866 = vmatpush2.msra.mxu0 0.0
    %1867 = vmatprep.subr.mxu0 0.0
    %1868 = vmatpush2.msra.mxu0 0.0
    %1869 = vmatprep.subr.mxu0 0.0
    %1870 = vmatpush2.msra.mxu0 0.0
    %1871 = vmatprep.subr.mxu0 0.0
    %1872 = vmatpush2.msra.mxu0 0.0
    %1873 = vmatprep.subr.mxu0 0.0
    %1874 = vmatpush2.msra.mxu0 0.0
    %1875 = vmatprep.subr.mxu0 0.0
    %1876 = vmatpush2.msra.mxu0 0.0
    %1877 = vmatprep.subr.mxu0 0.0
    %1878 = vmatpush2.msra.mxu0 0.0
    %1879 = vmatprep.subr.mxu0 0.0
    %1880 = vmatpush2.msra.mxu0 0.0
    %1881 = vmatprep.mubr.f32.mxu0 0.0
    %1882 = vmatmul.mubr.f32.gmra.mxu0 %v1815
    %v1883 = vpop.f32.mrf.mxu0
    %v1884 = vadd.f32 0.0, %v1883
    %v1885 = vpop.f32.mrf.mxu0
    %1886 = vdwg.mxu0
    %1887 = vrot.lane.b32.xlu0 %v624, 96
    %v1888 = vpop.permute.xlu0 %1887
    %v1891 = vsel %vm1266, %v1354, 0
    %1893 = vmatprep.subr.mxu0 0.0
    %1894 = vmatpush1.msra.mxu0 0.0
    %1895 = vmatprep.subr.mxu0 0.0
    %1896 = vmatpush1.msra.mxu0 0.0
    %1897 = vmatprep.subr.mxu0 0.0
    %1898 = vmatpush1.msra.mxu0 0.0
    %1899 = vmatprep.subr.mxu0 0.0
    %1900 = vmatpush1.msra.mxu0 0.0
    %1901 = vmatprep.subr.mxu0 0.0
    %1902 = vmatpush1.msra.mxu0 0.0
    %1903 = vmatprep.subr.mxu0 0.0
    %1904 = vmatpush1.msra.mxu0 0.0
    %1905 = vmatprep.subr.mxu0 0.0
    %1906 = vmatpush1.msra.mxu0 0.0
    %1907 = vmatprep.subr.mxu0 0.0
    %1908 = vmatpush1.msra.mxu0 0.0
    %1909 = vmatprep.subr.mxu0 0.0
    %1910 = vmatpush1.msra.mxu0 0.0
    %1911 = vmatprep.subr.mxu0 0.0
    %1912 = vmatpush1.msra.mxu0 0.0
    %1913 = vmatprep.subr.mxu0 0.0
    %1914 = vmatpush1.msra.mxu0 0.0
    %1915 = vmatprep.subr.mxu0 0.0
    %1916 = vmatpush1.msra.mxu0 0.0
    %1917 = vmatprep.subr.mxu0 0.0
    %1918 = vmatpush1.msra.mxu0 0.0
    %1919 = vmatprep.subr.mxu0 0.0
    %1920 = vmatpush1.msra.mxu0 0.0
    %1921 = vmatprep.subr.mxu0 0.0
    %1922 = vmatpush1.msra.mxu0 0.0
    %1923 = vmatprep.subr.mxu0 0.0
    %1924 = vmatpush1.msra.mxu0 %v1888
    %1925 = vmatprep.subr.mxu0 0.0
    %1926 = vmatpush2.msra.mxu0 0.0
    %1927 = vmatprep.subr.mxu0 0.0
    %1928 = vmatpush2.msra.mxu0 0.0
    %1929 = vmatprep.subr.mxu0 0.0
    %1930 = vmatpush2.msra.mxu0 0.0
    %1931 = vmatprep.subr.mxu0 0.0
    %1932 = vmatpush2.msra.mxu0 0.0
    %1933 = vmatprep.subr.mxu0 0.0
    %1934 = vmatpush2.msra.mxu0 0.0
    %1935 = vmatprep.subr.mxu0 0.0
    %1936 = vmatpush2.msra.mxu0 0.0
    %1937 = vmatprep.subr.mxu0 0.0
    %1938 = vmatpush2.msra.mxu0 0.0
    %1939 = vmatprep.subr.mxu0 0.0
    %1940 = vmatpush2.msra.mxu0 0.0
    %1941 = vmatprep.subr.mxu0 0.0
    %1942 = vmatpush2.msra.mxu0 0.0
    %1943 = vmatprep.subr.mxu0 0.0
    %1944 = vmatpush2.msra.mxu0 0.0
    %1945 = vmatprep.subr.mxu0 0.0
    %1946 = vmatpush2.msra.mxu0 0.0
    %1947 = vmatprep.subr.mxu0 0.0
    %1948 = vmatpush2.msra.mxu0 0.0
    %1949 = vmatprep.subr.mxu0 0.0
    %1950 = vmatpush2.msra.mxu0 0.0
    %1951 = vmatprep.subr.mxu0 0.0
    %1952 = vmatpush2.msra.mxu0 0.0
    %1953 = vmatprep.subr.mxu0 0.0
    %1954 = vmatpush2.msra.mxu0 0.0
    %1955 = vmatprep.subr.mxu0 0.0
    %1956 = vmatpush2.msra.mxu0 0.0
    %1957 = vmatprep.mubr.f32.mxu0 0.0
    %1958 = vmatmul.mubr.f32.gmra.mxu0 %v1891
    %v1959 = vpop.f32.mrf.mxu0
    %v1960 = vadd.f32 0.0, %v1959
    %v1961 = vpop.f32.mrf.mxu0
    %1962 = vdwg.mxu0
    %v1964 = vsel %vm636, %v1428, 0
    %1966 = vmatprep.subr.mxu0 0.0
    %1967 = vmatpush1.msra.mxu0 0.0
    %1968 = vmatprep.subr.mxu0 0.0
    %1969 = vmatpush1.msra.mxu0 0.0
    %1970 = vmatprep.subr.mxu0 0.0
    %1971 = vmatpush1.msra.mxu0 0.0
    %1972 = vmatprep.subr.mxu0 0.0
    %1973 = vmatpush1.msra.mxu0 0.0
    %1974 = vmatprep.subr.mxu0 0.0
    %1975 = vmatpush1.msra.mxu0 0.0
    %1976 = vmatprep.subr.mxu0 0.0
    %1977 = vmatpush1.msra.mxu0 0.0
    %1978 = vmatprep.subr.mxu0 0.0
    %1979 = vmatpush1.msra.mxu0 0.0
    %1980 = vmatprep.subr.mxu0 0.0
    %1981 = vmatpush1.msra.mxu0 0.0
    %1982 = vmatprep.subr.mxu0 0.0
    %1983 = vmatpush1.msra.mxu0 0.0
    %1984 = vmatprep.subr.mxu0 0.0
    %1985 = vmatpush1.msra.mxu0 0.0
    %1986 = vmatprep.subr.mxu0 0.0
    %1987 = vmatpush1.msra.mxu0 0.0
    %1988 = vmatprep.subr.mxu0 0.0
    %1989 = vmatpush1.msra.mxu0 0.0
    %1990 = vmatprep.subr.mxu0 0.0
    %1991 = vmatpush1.msra.mxu0 0.0
    %1992 = vmatprep.subr.mxu0 0.0
    %1993 = vmatpush1.msra.mxu0 0.0
    %1994 = vmatprep.subr.mxu0 0.0
    %1995 = vmatpush1.msra.mxu0 %v53
    %1996 = vmatprep.subr.mxu0 0.0
    %1997 = vmatpush1.msra.mxu0 %v52
    %1998 = vmatprep.subr.mxu0 0.0
    %1999 = vmatpush2.msra.mxu0 0.0
    %2000 = vmatprep.subr.mxu0 0.0
    %2001 = vmatpush2.msra.mxu0 0.0
    %2002 = vmatprep.subr.mxu0 0.0
    %2003 = vmatpush2.msra.mxu0 0.0
    %2004 = vmatprep.subr.mxu0 0.0
    %2005 = vmatpush2.msra.mxu0 0.0
    %2006 = vmatprep.subr.mxu0 0.0
    %2007 = vmatpush2.msra.mxu0 0.0
    %2008 = vmatprep.subr.mxu0 0.0
    %2009 = vmatpush2.msra.mxu0 0.0
    %2010 = vmatprep.subr.mxu0 0.0
    %2011 = vmatpush2.msra.mxu0 0.0
    %2012 = vmatprep.subr.mxu0 0.0
    %2013 = vmatpush2.msra.mxu0 0.0
    %2014 = vmatprep.subr.mxu0 0.0
    %2015 = vmatpush2.msra.mxu0 0.0
    %2016 = vmatprep.subr.mxu0 0.0
    %2017 = vmatpush2.msra.mxu0 0.0
    %2018 = vmatprep.subr.mxu0 0.0
    %2019 = vmatpush2.msra.mxu0 0.0
    %2020 = vmatprep.subr.mxu0 0.0
    %2021 = vmatpush2.msra.mxu0 0.0
    %2022 = vmatprep.subr.mxu0 0.0
    %2023 = vmatpush2.msra.mxu0 0.0
    %2024 = vmatprep.subr.mxu0 0.0
    %2025 = vmatpush2.msra.mxu0 0.0
    %2026 = vmatprep.subr.mxu0 0.0
    %2027 = vmatpush2.msra.mxu0 0.0
    %2028 = vmatprep.subr.mxu0 0.0
    %2029 = vmatpush2.msra.mxu0 0.0
    %2030 = vmatprep.mubr.f32.mxu0 0.0
    %2031 = vmatmul.mubr.f32.gmra.mxu0 %v1964
    %v2032 = vpop.f32.mrf.mxu0
    %v2033 = vadd.f32 0.0, %v2032
    %v2034 = vpop.f32.mrf.mxu0
    %2035 = vdwg.mxu0
    %v2037 = vsel %vm636, %v1504, 0
    %2039 = vmatprep.subr.mxu0 0.0
    %2040 = vmatpush1.msra.mxu0 0.0
    %2041 = vmatprep.subr.mxu0 0.0
    %2042 = vmatpush1.msra.mxu0 0.0
    %2043 = vmatprep.subr.mxu0 0.0
    %2044 = vmatpush1.msra.mxu0 0.0
    %2045 = vmatprep.subr.mxu0 0.0
    %2046 = vmatpush1.msra.mxu0 0.0
    %2047 = vmatprep.subr.mxu0 0.0
    %2048 = vmatpush1.msra.mxu0 0.0
    %2049 = vmatprep.subr.mxu0 0.0
    %2050 = vmatpush1.msra.mxu0 0.0
    %2051 = vmatprep.subr.mxu0 0.0
    %2052 = vmatpush1.msra.mxu0 0.0
    %2053 = vmatprep.subr.mxu0 0.0
    %2054 = vmatpush1.msra.mxu0 0.0
    %2055 = vmatprep.subr.mxu0 0.0
    %2056 = vmatpush1.msra.mxu0 0.0
    %2057 = vmatprep.subr.mxu0 0.0
    %2058 = vmatpush1.msra.mxu0 0.0
    %2059 = vmatprep.subr.mxu0 0.0
    %2060 = vmatpush1.msra.mxu0 0.0
    %2061 = vmatprep.subr.mxu0 0.0
    %2062 = vmatpush1.msra.mxu0 0.0
    %2063 = vmatprep.subr.mxu0 0.0
    %2064 = vmatpush1.msra.mxu0 0.0
    %2065 = vmatprep.subr.mxu0 0.0
    %2066 = vmatpush1.msra.mxu0 0.0
    %2067 = vmatprep.subr.mxu0 0.0
    %2068 = vmatpush1.msra.mxu0 %v55
    %2069 = vmatprep.subr.mxu0 0.0
    %2070 = vmatpush1.msra.mxu0 %v54
    %2071 = vmatprep.subr.mxu0 0.0
    %2072 = vmatpush2.msra.mxu0 0.0
    %2073 = vmatprep.subr.mxu0 0.0
    %2074 = vmatpush2.msra.mxu0 0.0
    %2075 = vmatprep.subr.mxu0 0.0
    %2076 = vmatpush2.msra.mxu0 0.0
    %2077 = vmatprep.subr.mxu0 0.0
    %2078 = vmatpush2.msra.mxu0 0.0
    %2079 = vmatprep.subr.mxu0 0.0
    %2080 = vmatpush2.msra.mxu0 0.0
    %2081 = vmatprep.subr.mxu0 0.0
    %2082 = vmatpush2.msra.mxu0 0.0
    %2083 = vmatprep.subr.mxu0 0.0
    %2084 = vmatpush2.msra.mxu0 0.0
    %2085 = vmatprep.subr.mxu0 0.0
    %2086 = vmatpush2.msra.mxu0 0.0
    %2087 = vmatprep.subr.mxu0 0.0
    %2088 = vmatpush2.msra.mxu0 0.0
    %2089 = vmatprep.subr.mxu0 0.0
    %2090 = vmatpush2.msra.mxu0 0.0
    %2091 = vmatprep.subr.mxu0 0.0
    %2092 = vmatpush2.msra.mxu0 0.0
    %2093 = vmatprep.subr.mxu0 0.0
    %2094 = vmatpush2.msra.mxu0 0.0
    %2095 = vmatprep.subr.mxu0 0.0
    %2096 = vmatpush2.msra.mxu0 0.0
    %2097 = vmatprep.subr.mxu0 0.0
    %2098 = vmatpush2.msra.mxu0 0.0
    %2099 = vmatprep.subr.mxu0 0.0
    %2100 = vmatpush2.msra.mxu0 0.0
    %2101 = vmatprep.subr.mxu0 0.0
    %2102 = vmatpush2.msra.mxu0 0.0
    %2103 = vmatprep.mubr.f32.mxu0 0.0
    %2104 = vmatmul.mubr.f32.gmra.mxu0 %v2037
    %v2105 = vpop.f32.mrf.mxu0
    %v2106 = vadd.f32 0.0, %v2105
    %v2107 = vpop.f32.mrf.mxu0
    %2108 = vdwg.mxu0
    %v2110 = vsel %vm636, %v1580, 0
    %2112 = vmatprep.subr.mxu0 0.0
    %2113 = vmatpush1.msra.mxu0 0.0
    %2114 = vmatprep.subr.mxu0 0.0
    %2115 = vmatpush1.msra.mxu0 0.0
    %2116 = vmatprep.subr.mxu0 0.0
    %2117 = vmatpush1.msra.mxu0 0.0
    %2118 = vmatprep.subr.mxu0 0.0
    %2119 = vmatpush1.msra.mxu0 0.0
    %2120 = vmatprep.subr.mxu0 0.0
    %2121 = vmatpush1.msra.mxu0 0.0
    %2122 = vmatprep.subr.mxu0 0.0
    %2123 = vmatpush1.msra.mxu0 0.0
    %2124 = vmatprep.subr.mxu0 0.0
    %2125 = vmatpush1.msra.mxu0 0.0
    %2126 = vmatprep.subr.mxu0 0.0
    %2127 = vmatpush1.msra.mxu0 0.0
    %2128 = vmatprep.subr.mxu0 0.0
    %2129 = vmatpush1.msra.mxu0 0.0
    %2130 = vmatprep.subr.mxu0 0.0
    %2131 = vmatpush1.msra.mxu0 0.0
    %2132 = vmatprep.subr.mxu0 0.0
    %2133 = vmatpush1.msra.mxu0 0.0
    %2134 = vmatprep.subr.mxu0 0.0
    %2135 = vmatpush1.msra.mxu0 0.0
    %2136 = vmatprep.subr.mxu0 0.0
    %2137 = vmatpush1.msra.mxu0 0.0
    %2138 = vmatprep.subr.mxu0 0.0
    %2139 = vmatpush1.msra.mxu0 0.0
    %2140 = vmatprep.subr.mxu0 0.0
    %2141 = vmatpush1.msra.mxu0 %v57
    %2142 = vmatprep.subr.mxu0 0.0
    %2143 = vmatpush1.msra.mxu0 %v56
    %2144 = vmatprep.subr.mxu0 0.0
    %2145 = vmatpush2.msra.mxu0 0.0
    %2146 = vmatprep.subr.mxu0 0.0
    %2147 = vmatpush2.msra.mxu0 0.0
    %2148 = vmatprep.subr.mxu0 0.0
    %2149 = vmatpush2.msra.mxu0 0.0
    %2150 = vmatprep.subr.mxu0 0.0
    %2151 = vmatpush2.msra.mxu0 0.0
    %2152 = vmatprep.subr.mxu0 0.0
    %2153 = vmatpush2.msra.mxu0 0.0
    %2154 = vmatprep.subr.mxu0 0.0
    %2155 = vmatpush2.msra.mxu0 0.0
    %2156 = vmatprep.subr.mxu0 0.0
    %2157 = vmatpush2.msra.mxu0 0.0
    %2158 = vmatprep.subr.mxu0 0.0
    %2159 = vmatpush2.msra.mxu0 0.0
    %2160 = vmatprep.subr.mxu0 0.0
    %2161 = vmatpush2.msra.mxu0 0.0
    %2162 = vmatprep.subr.mxu0 0.0
    %2163 = vmatpush2.msra.mxu0 0.0
    %2164 = vmatprep.subr.mxu0 0.0
    %2165 = vmatpush2.msra.mxu0 0.0
    %2166 = vmatprep.subr.mxu0 0.0
    %2167 = vmatpush2.msra.mxu0 0.0
    %2168 = vmatprep.subr.mxu0 0.0
    %2169 = vmatpush2.msra.mxu0 0.0
    %2170 = vmatprep.subr.mxu0 0.0
    %2171 = vmatpush2.msra.mxu0 0.0
    %2172 = vmatprep.subr.mxu0 0.0
    %2173 = vmatpush2.msra.mxu0 0.0
    %2174 = vmatprep.subr.mxu0 0.0
    %2175 = vmatpush2.msra.mxu0 0.0
    %2176 = vmatprep.mubr.f32.mxu0 0.0
    %2177 = vmatmul.mubr.f32.gmra.mxu0 %v2110
    %v2178 = vpop.f32.mrf.mxu0
    %v2179 = vadd.f32 0.0, %v2178
    %v2180 = vpop.f32.mrf.mxu0
    %2181 = vdwg.mxu0
    %v2183 = vsel %vm636, %v1656, 0
    %2185 = vmatprep.subr.mxu0 0.0
    %2186 = vmatpush1.msra.mxu0 0.0
    %2187 = vmatprep.subr.mxu0 0.0
    %2188 = vmatpush1.msra.mxu0 0.0
    %2189 = vmatprep.subr.mxu0 0.0
    %2190 = vmatpush1.msra.mxu0 0.0
    %2191 = vmatprep.subr.mxu0 0.0
    %2192 = vmatpush1.msra.mxu0 0.0
    %2193 = vmatprep.subr.mxu0 0.0
    %2194 = vmatpush1.msra.mxu0 0.0
    %2195 = vmatprep.subr.mxu0 0.0
    %2196 = vmatpush1.msra.mxu0 0.0
    %2197 = vmatprep.subr.mxu0 0.0
    %2198 = vmatpush1.msra.mxu0 0.0
    %2199 = vmatprep.subr.mxu0 0.0
    %2200 = vmatpush1.msra.mxu0 0.0
    %2201 = vmatprep.subr.mxu0 0.0
    %2202 = vmatpush1.msra.mxu0 0.0
    %2203 = vmatprep.subr.mxu0 0.0
    %2204 = vmatpush1.msra.mxu0 0.0
    %2205 = vmatprep.subr.mxu0 0.0
    %2206 = vmatpush1.msra.mxu0 0.0
    %2207 = vmatprep.subr.mxu0 0.0
    %2208 = vmatpush1.msra.mxu0 0.0
    %2209 = vmatprep.subr.mxu0 0.0
    %2210 = vmatpush1.msra.mxu0 0.0
    %2211 = vmatprep.subr.mxu0 0.0
    %2212 = vmatpush1.msra.mxu0 0.0
    %2213 = vmatprep.subr.mxu0 0.0
    %2214 = vmatpush1.msra.mxu0 %v59
    %2215 = vmatprep.subr.mxu0 0.0
    %2216 = vmatpush1.msra.mxu0 %v58
    %2217 = vmatprep.subr.mxu0 0.0
    %2218 = vmatpush2.msra.mxu0 0.0
    %2219 = vmatprep.subr.mxu0 0.0
    %2220 = vmatpush2.msra.mxu0 0.0
    %2221 = vmatprep.subr.mxu0 0.0
    %2222 = vmatpush2.msra.mxu0 0.0
    %2223 = vmatprep.subr.mxu0 0.0
    %2224 = vmatpush2.msra.mxu0 0.0
    %2225 = vmatprep.subr.mxu0 0.0
    %2226 = vmatpush2.msra.mxu0 0.0
    %2227 = vmatprep.subr.mxu0 0.0
    %2228 = vmatpush2.msra.mxu0 0.0
    %2229 = vmatprep.subr.mxu0 0.0
    %2230 = vmatpush2.msra.mxu0 0.0
    %2231 = vmatprep.subr.mxu0 0.0
    %2232 = vmatpush2.msra.mxu0 0.0
    %2233 = vmatprep.subr.mxu0 0.0
    %2234 = vmatpush2.msra.mxu0 0.0
    %2235 = vmatprep.subr.mxu0 0.0
    %2236 = vmatpush2.msra.mxu0 0.0
    %2237 = vmatprep.subr.mxu0 0.0
    %2238 = vmatpush2.msra.mxu0 0.0
    %2239 = vmatprep.subr.mxu0 0.0
    %2240 = vmatpush2.msra.mxu0 0.0
    %2241 = vmatprep.subr.mxu0 0.0
    %2242 = vmatpush2.msra.mxu0 0.0
    %2243 = vmatprep.subr.mxu0 0.0
    %2244 = vmatpush2.msra.mxu0 0.0
    %2245 = vmatprep.subr.mxu0 0.0
    %2246 = vmatpush2.msra.mxu0 0.0
    %2247 = vmatprep.subr.mxu0 0.0
    %2248 = vmatpush2.msra.mxu0 0.0
    %2249 = vmatprep.mubr.f32.mxu0 0.0
    %2250 = vmatmul.mubr.f32.gmra.mxu0 %v2183
    %v2251 = vpop.f32.mrf.mxu0
    %v2252 = vadd.f32 0.0, %v2251
    %v2253 = vpop.f32.mrf.mxu0
    %2254 = vdwg.mxu0
    %v2256 = vsel %vm636, %v1732, 0
    %2258 = vmatprep.subr.mxu0 0.0
    %2259 = vmatpush1.msra.mxu0 0.0
    %2260 = vmatprep.subr.mxu0 0.0
    %2261 = vmatpush1.msra.mxu0 0.0
    %2262 = vmatprep.subr.mxu0 0.0
    %2263 = vmatpush1.msra.mxu0 0.0
    %2264 = vmatprep.subr.mxu0 0.0
    %2265 = vmatpush1.msra.mxu0 0.0
    %2266 = vmatprep.subr.mxu0 0.0
    %2267 = vmatpush1.msra.mxu0 0.0
    %2268 = vmatprep.subr.mxu0 0.0
    %2269 = vmatpush1.msra.mxu0 0.0
    %2270 = vmatprep.subr.mxu0 0.0
    %2271 = vmatpush1.msra.mxu0 0.0
    %2272 = vmatprep.subr.mxu0 0.0
    %2273 = vmatpush1.msra.mxu0 0.0
    %2274 = vmatprep.subr.mxu0 0.0
    %2275 = vmatpush1.msra.mxu0 0.0
    %2276 = vmatprep.subr.mxu0 0.0
    %2277 = vmatpush1.msra.mxu0 0.0
    %2278 = vmatprep.subr.mxu0 0.0
    %2279 = vmatpush1.msra.mxu0 0.0
    %2280 = vmatprep.subr.mxu0 0.0
    %2281 = vmatpush1.msra.mxu0 0.0
    %2282 = vmatprep.subr.mxu0 0.0
    %2283 = vmatpush1.msra.mxu0 0.0
    %2284 = vmatprep.subr.mxu0 0.0
    %2285 = vmatpush1.msra.mxu0 0.0
    %2286 = vmatprep.subr.mxu0 0.0
    %2287 = vmatpush1.msra.mxu0 %v53
    %2288 = vmatprep.subr.mxu0 0.0
    %2289 = vmatpush1.msra.mxu0 %v52
    %2290 = vmatprep.subr.mxu0 0.0
    %2291 = vmatpush2.msra.mxu0 0.0
    %2292 = vmatprep.subr.mxu0 0.0
    %2293 = vmatpush2.msra.mxu0 0.0
    %2294 = vmatprep.subr.mxu0 0.0
    %2295 = vmatpush2.msra.mxu0 0.0
    %2296 = vmatprep.subr.mxu0 0.0
    %2297 = vmatpush2.msra.mxu0 0.0
    %2298 = vmatprep.subr.mxu0 0.0
    %2299 = vmatpush2.msra.mxu0 0.0
    %2300 = vmatprep.subr.mxu0 0.0
    %2301 = vmatpush2.msra.mxu0 0.0
    %2302 = vmatprep.subr.mxu0 0.0
    %2303 = vmatpush2.msra.mxu0 0.0
    %2304 = vmatprep.subr.mxu0 0.0
    %2305 = vmatpush2.msra.mxu0 0.0
    %2306 = vmatprep.subr.mxu0 0.0
    %2307 = vmatpush2.msra.mxu0 0.0
    %2308 = vmatprep.subr.mxu0 0.0
    %2309 = vmatpush2.msra.mxu0 0.0
    %2310 = vmatprep.subr.mxu0 0.0
    %2311 = vmatpush2.msra.mxu0 0.0
    %2312 = vmatprep.subr.mxu0 0.0
    %2313 = vmatpush2.msra.mxu0 0.0
    %2314 = vmatprep.subr.mxu0 0.0
    %2315 = vmatpush2.msra.mxu0 0.0
    %2316 = vmatprep.subr.mxu0 0.0
    %2317 = vmatpush2.msra.mxu0 0.0
    %2318 = vmatprep.subr.mxu0 0.0
    %2319 = vmatpush2.msra.mxu0 0.0
    %2320 = vmatprep.subr.mxu0 0.0
    %2321 = vmatpush2.msra.mxu0 0.0
    %2322 = vmatprep.mubr.f32.mxu0 0.0
    %2323 = vmatmul.mubr.f32.gmra.mxu0 %v2256
    %v2324 = vpop.f32.mrf.mxu0
    %v2325 = vadd.f32 0.0, %v2324
    %v2326 = vpop.f32.mrf.mxu0
    %2327 = vdwg.mxu0
    %v2329 = vsel %vm636, %v1808, 0
    %2331 = vmatprep.subr.mxu0 0.0
    %2332 = vmatpush1.msra.mxu0 0.0
    %2333 = vmatprep.subr.mxu0 0.0
    %2334 = vmatpush1.msra.mxu0 0.0
    %2335 = vmatprep.subr.mxu0 0.0
    %2336 = vmatpush1.msra.mxu0 0.0
    %2337 = vmatprep.subr.mxu0 0.0
    %2338 = vmatpush1.msra.mxu0 0.0
    %2339 = vmatprep.subr.mxu0 0.0
    %2340 = vmatpush1.msra.mxu0 0.0
    %2341 = vmatprep.subr.mxu0 0.0
    %2342 = vmatpush1.msra.mxu0 0.0
    %2343 = vmatprep.subr.mxu0 0.0
    %2344 = vmatpush1.msra.mxu0 0.0
    %2345 = vmatprep.subr.mxu0 0.0
    %2346 = vmatpush1.msra.mxu0 0.0
    %2347 = vmatprep.subr.mxu0 0.0
    %2348 = vmatpush1.msra.mxu0 0.0
    %2349 = vmatprep.subr.mxu0 0.0
    %2350 = vmatpush1.msra.mxu0 0.0
    %2351 = vmatprep.subr.mxu0 0.0
    %2352 = vmatpush1.msra.mxu0 0.0
    %2353 = vmatprep.subr.mxu0 0.0
    %2354 = vmatpush1.msra.mxu0 0.0
    %2355 = vmatprep.subr.mxu0 0.0
    %2356 = vmatpush1.msra.mxu0 0.0
    %2357 = vmatprep.subr.mxu0 0.0
    %2358 = vmatpush1.msra.mxu0 0.0
    %2359 = vmatprep.subr.mxu0 0.0
    %2360 = vmatpush1.msra.mxu0 %v55
    %2361 = vmatprep.subr.mxu0 0.0
    %2362 = vmatpush1.msra.mxu0 %v54
    %2363 = vmatprep.subr.mxu0 0.0
    %2364 = vmatpush2.msra.mxu0 0.0
    %2365 = vmatprep.subr.mxu0 0.0
    %2366 = vmatpush2.msra.mxu0 0.0
    %2367 = vmatprep.subr.mxu0 0.0
    %2368 = vmatpush2.msra.mxu0 0.0
    %2369 = vmatprep.subr.mxu0 0.0
    %2370 = vmatpush2.msra.mxu0 0.0
    %2371 = vmatprep.subr.mxu0 0.0
    %2372 = vmatpush2.msra.mxu0 0.0
    %2373 = vmatprep.subr.mxu0 0.0
    %2374 = vmatpush2.msra.mxu0 0.0
    %2375 = vmatprep.subr.mxu0 0.0
    %2376 = vmatpush2.msra.mxu0 0.0
    %2377 = vmatprep.subr.mxu0 0.0
    %2378 = vmatpush2.msra.mxu0 0.0
    %2379 = vmatprep.subr.mxu0 0.0
    %2380 = vmatpush2.msra.mxu0 0.0
    %2381 = vmatprep.subr.mxu0 0.0
    %2382 = vmatpush2.msra.mxu0 0.0
    %2383 = vmatprep.subr.mxu0 0.0
    %2384 = vmatpush2.msra.mxu0 0.0
    %2385 = vmatprep.subr.mxu0 0.0
    %2386 = vmatpush2.msra.mxu0 0.0
    %2387 = vmatprep.subr.mxu0 0.0
    %2388 = vmatpush2.msra.mxu0 0.0
    %2389 = vmatprep.subr.mxu0 0.0
    %2390 = vmatpush2.msra.mxu0 0.0
    %2391 = vmatprep.subr.mxu0 0.0
    %2392 = vmatpush2.msra.mxu0 0.0
    %2393 = vmatprep.subr.mxu0 0.0
    %2394 = vmatpush2.msra.mxu0 0.0
    %2395 = vmatprep.mubr.f32.mxu0 0.0
    %2396 = vmatmul.mubr.f32.gmra.mxu0 %v2329
    %v2397 = vpop.f32.mrf.mxu0
    %v2398 = vadd.f32 0.0, %v2397
    %v2399 = vpop.f32.mrf.mxu0
    %2400 = vdwg.mxu0
    %v2402 = vsel %vm636, %v1884, 0
    %2404 = vmatprep.subr.mxu0 0.0
    %2405 = vmatpush1.msra.mxu0 0.0
    %2406 = vmatprep.subr.mxu0 0.0
    %2407 = vmatpush1.msra.mxu0 0.0
    %2408 = vmatprep.subr.mxu0 0.0
    %2409 = vmatpush1.msra.mxu0 0.0
    %2410 = vmatprep.subr.mxu0 0.0
    %2411 = vmatpush1.msra.mxu0 0.0
    %2412 = vmatprep.subr.mxu0 0.0
    %2413 = vmatpush1.msra.mxu0 0.0
    %2414 = vmatprep.subr.mxu0 0.0
    %2415 = vmatpush1.msra.mxu0 0.0
    %2416 = vmatprep.subr.mxu0 0.0
    %2417 = vmatpush1.msra.mxu0 0.0
    %2418 = vmatprep.subr.mxu0 0.0
    %2419 = vmatpush1.msra.mxu0 0.0
    %2420 = vmatprep.subr.mxu0 0.0
    %2421 = vmatpush1.msra.mxu0 0.0
    %2422 = vmatprep.subr.mxu0 0.0
    %2423 = vmatpush1.msra.mxu0 0.0
    %2424 = vmatprep.subr.mxu0 0.0
    %2425 = vmatpush1.msra.mxu0 0.0
    %2426 = vmatprep.subr.mxu0 0.0
    %2427 = vmatpush1.msra.mxu0 0.0
    %2428 = vmatprep.subr.mxu0 0.0
    %2429 = vmatpush1.msra.mxu0 0.0
    %2430 = vmatprep.subr.mxu0 0.0
    %2431 = vmatpush1.msra.mxu0 0.0
    %2432 = vmatprep.subr.mxu0 0.0
    %2433 = vmatpush1.msra.mxu0 %v57
    %2434 = vmatprep.subr.mxu0 0.0
    %2435 = vmatpush1.msra.mxu0 %v56
    %2436 = vmatprep.subr.mxu0 0.0
    %2437 = vmatpush2.msra.mxu0 0.0
    %2438 = vmatprep.subr.mxu0 0.0
    %2439 = vmatpush2.msra.mxu0 0.0
    %2440 = vmatprep.subr.mxu0 0.0
    %2441 = vmatpush2.msra.mxu0 0.0
    %2442 = vmatprep.subr.mxu0 0.0
    %2443 = vmatpush2.msra.mxu0 0.0
    %2444 = vmatprep.subr.mxu0 0.0
    %2445 = vmatpush2.msra.mxu0 0.0
    %2446 = vmatprep.subr.mxu0 0.0
    %2447 = vmatpush2.msra.mxu0 0.0
    %2448 = vmatprep.subr.mxu0 0.0
    %2449 = vmatpush2.msra.mxu0 0.0
    %2450 = vmatprep.subr.mxu0 0.0
    %2451 = vmatpush2.msra.mxu0 0.0
    %2452 = vmatprep.subr.mxu0 0.0
    %2453 = vmatpush2.msra.mxu0 0.0
    %2454 = vmatprep.subr.mxu0 0.0
    %2455 = vmatpush2.msra.mxu0 0.0
    %2456 = vmatprep.subr.mxu0 0.0
    %2457 = vmatpush2.msra.mxu0 0.0
    %2458 = vmatprep.subr.mxu0 0.0
    %2459 = vmatpush2.msra.mxu0 0.0
    %2460 = vmatprep.subr.mxu0 0.0
    %2461 = vmatpush2.msra.mxu0 0.0
    %2462 = vmatprep.subr.mxu0 0.0
    %2463 = vmatpush2.msra.mxu0 0.0
    %2464 = vmatprep.subr.mxu0 0.0
    %2465 = vmatpush2.msra.mxu0 0.0
    %2466 = vmatprep.subr.mxu0 0.0
    %2467 = vmatpush2.msra.mxu0 0.0
    %2468 = vmatprep.mubr.f32.mxu0 0.0
    %2469 = vmatmul.mubr.f32.gmra.mxu0 %v2402
    %v2470 = vpop.f32.mrf.mxu0
    %v2471 = vadd.f32 0.0, %v2470
    %v2472 = vpop.f32.mrf.mxu0
    %2473 = vdwg.mxu0
    %v2475 = vsel %vm636, %v1960, 0
    %2477 = vmatprep.subr.mxu0 0.0
    %2478 = vmatpush1.msra.mxu0 0.0
    %2479 = vmatprep.subr.mxu0 0.0
    %2480 = vmatpush1.msra.mxu0 0.0
    %2481 = vmatprep.subr.mxu0 0.0
    %2482 = vmatpush1.msra.mxu0 0.0
    %2483 = vmatprep.subr.mxu0 0.0
    %2484 = vmatpush1.msra.mxu0 0.0
    %2485 = vmatprep.subr.mxu0 0.0
    %2486 = vmatpush1.msra.mxu0 0.0
    %2487 = vmatprep.subr.mxu0 0.0
    %2488 = vmatpush1.msra.mxu0 0.0
    %2489 = vmatprep.subr.mxu0 0.0
    %2490 = vmatpush1.msra.mxu0 0.0
    %2491 = vmatprep.subr.mxu0 0.0
    %2492 = vmatpush1.msra.mxu0 0.0
    %2493 = vmatprep.subr.mxu0 0.0
    %2494 = vmatpush1.msra.mxu0 0.0
    %2495 = vmatprep.subr.mxu0 0.0
    %2496 = vmatpush1.msra.mxu0 0.0
    %2497 = vmatprep.subr.mxu0 0.0
    %2498 = vmatpush1.msra.mxu0 0.0
    %2499 = vmatprep.subr.mxu0 0.0
    %2500 = vmatpush1.msra.mxu0 0.0
    %2501 = vmatprep.subr.mxu0 0.0
    %2502 = vmatpush1.msra.mxu0 0.0
    %2503 = vmatprep.subr.mxu0 0.0
    %2504 = vmatpush1.msra.mxu0 0.0
    %2505 = vmatprep.subr.mxu0 0.0
    %2506 = vmatpush1.msra.mxu0 %v59
    %2507 = vmatprep.subr.mxu0 0.0
    %2508 = vmatpush1.msra.mxu0 %v58
    %2509 = vmatprep.subr.mxu0 0.0
    %2510 = vmatpush2.msra.mxu0 0.0
    %2511 = vmatprep.subr.mxu0 0.0
    %2512 = vmatpush2.msra.mxu0 0.0
    %2513 = vmatprep.subr.mxu0 0.0
    %2514 = vmatpush2.msra.mxu0 0.0
    %2515 = vmatprep.subr.mxu0 0.0
    %2516 = vmatpush2.msra.mxu0 0.0
    %2517 = vmatprep.subr.mxu0 0.0
    %2518 = vmatpush2.msra.mxu0 0.0
    %2519 = vmatprep.subr.mxu0 0.0
    %2520 = vmatpush2.msra.mxu0 0.0
    %2521 = vmatprep.subr.mxu0 0.0
    %2522 = vmatpush2.msra.mxu0 0.0
    %2523 = vmatprep.subr.mxu0 0.0
    %2524 = vmatpush2.msra.mxu0 0.0
    %2525 = vmatprep.subr.mxu0 0.0
    %2526 = vmatpush2.msra.mxu0 0.0
    %2527 = vmatprep.subr.mxu0 0.0
    %2528 = vmatpush2.msra.mxu0 0.0
    %2529 = vmatprep.subr.mxu0 0.0
    %2530 = vmatpush2.msra.mxu0 0.0
    %2531 = vmatprep.subr.mxu0 0.0
    %2532 = vmatpush2.msra.mxu0 0.0
    %2533 = vmatprep.subr.mxu0 0.0
    %2534 = vmatpush2.msra.mxu0 0.0
    %2535 = vmatprep.subr.mxu0 0.0
    %2536 = vmatpush2.msra.mxu0 0.0
    %2537 = vmatprep.subr.mxu0 0.0
    %2538 = vmatpush2.msra.mxu0 0.0
    %2539 = vmatprep.subr.mxu0 0.0
    %2540 = vmatpush2.msra.mxu0 0.0
    %2541 = vmatprep.mubr.f32.mxu0 0.0
    %2542 = vmatmul.mubr.f32.gmra.mxu0 %v2475
    %v2543 = vpop.f32.mrf.mxu0
    %v2544 = vadd.f32 0.0, %v2543
    %v2545 = vpop.f32.mrf.mxu0
    %2546 = vdwg.mxu0
    %v2547 = vadd.f32 %v2033, %v2106
    %v2548 = vadd.f32 %v2325, %v2398
    %v2549 = vadd.f32 %v2547, %v2179
    %v2550 = vadd.f32 %v2548, %v2471
    %v2551 = vadd.f32 %v2549, %v2252
    %v2552 = vadd.f32 %v2550, %v2544
    %v2553 = vld [vmem:[%s3] sm:$0x1]
    %v2555 = vlaneseq
    %v2556 = vshrl.u32 %v2555, 7
    %v2557 = vsub.s32 0, %v2556
    %v2558 = vrot.slane %v2553, %v2557
    %v2560 = vadd.f32 %v2551, %v2558
    %v2561 = vadd.f32 %v2552, %v2558
    %2562 = vst.msk [vmem:[#allocation2] sm:$0xff] %vm60, %v2560
    %2563 = vst.msk [vmem:[#allocation2 + $0x8] sm:$0xff] %vm60, %v2561
    // Predicated region
    $region18: #{tpu_custom_call.1} parent=1 // pred_check
      _
    $region19: #{tpu_custom_call.1} parent=1 // pred_check_branch
      %2565 = sbr.rel (0) target = $region21
    $region20: #{tpu_custom_call.1} parent=1 // pred_region
      %s2567 = ssub.s32 256, 256
      %2568 = vsyncadd [#allocation3], %s2567
      %s2569 = sshll.u32 [#allocation2], 4
      %s2570 = int_to_ptr.vmem [resolvable:$true] %s2569
      %2575 = dma.vmem_to_hbm [thread:$0]  %s2570, 256, %s4, [#allocation3], 128, 128, 8
    $region21: #{tpu_custom_call.1} parent=1 // pred_fallthru
      _
    // Predicated region
    $region22: #{tpu_custom_call.1} parent=1 // pred_check
      _
    $region23: #{tpu_custom_call.1} parent=1 // pred_check_branch
      %2577 = sbr.rel (0) target = $region25
    $region24: #{tpu_custom_call.1} parent=1 // pred_region
      %2578 = dma.done [#allocation3], 256
    $region25: #{tpu_custom_call.1} parent=1 // pred_fallthru
      _
    %2579 = vsyncpa [#allocation3], 1

</llo_original>
